<compile_context>
chip_gen: v5e
topology: v5e:2x2
jax: 0.10.0
libtpu: 0.0.40
codegen_flags: <defaults>
</compile_context>

<pallas_src>
import math
import functools

import jax
import jax.numpy as jnp
from jax.experimental import pallas as pl
from jax.experimental.pallas import tpu as pltpu


def _attn_kernel(x_ref, wqkv_ref, bqkv_ref, o_ref, *, num_heads, head_dim):
    S = x_ref.shape[1]
    E = num_heads * head_dim

    # Fused QKV projection: (S, E) @ (E, 3E) -> (S, 3E), f32 accumulation.
    x = x_ref[0]                                           # keep native dtype for the MXU
    qkv = jnp.dot(x, wqkv_ref[...],
                  preferred_element_type=jnp.float32) + bqkv_ref[0]   # (S, 3E) f32

    inv_scale = 1.0 / math.sqrt(float(head_dim))
    q = qkv[:, :E] * inv_scale                             # fold scale into Q (S x E mul)
    k = qkv[:, E:2 * E]
    v = qkv[:, 2 * E:]

    # (S, E) -> (H, S, Dh): heads become the batch dim of one big einsum stream.
    qh = jnp.transpose(q.reshape(S, num_heads, head_dim), (1, 0, 2))
    kh = jnp.transpose(k.reshape(S, num_heads, head_dim), (1, 0, 2))
    vh = jnp.transpose(v.reshape(S, num_heads, head_dim), (1, 0, 2))

    # Scores for all heads at once; contraction over Dh without explicit K^T.
    scores = jnp.einsum('hqd,hkd->hqk', qh, kh,
                        preferred_element_type=jnp.float32)           # (H, S, S)

    # Numerically-stable softmax along the key axis (f32 throughout).
    m = jnp.max(scores, axis=-1, keepdims=True)
    p = jnp.exp(scores - m)
    denom = jnp.sum(p, axis=-1, keepdims=True)
    p = p * pl.reciprocal(denom, approx=True)              # EUP slot, ~free

    # Attention output for all heads, then a single lane-dense (S, E) store.
    oh = jnp.einsum('hqk,hkd->hqd', p, vh,
                    preferred_element_type=jnp.float32)               # (H, S, Dh)
    out = jnp.transpose(oh, (1, 0, 2)).reshape(S, E)                  # (S, E)
    o_ref[0] = out.astype(o_ref.dtype)


def scaled_dot_product_attention(x, wq, bq, wk, bk, wv, bv, *, num_heads):
    """x: (B, S, E); w*: PyTorch-style (E_out, E_in); b*: (E,)."""
    B, S, E = x.shape
    head_dim = E // num_heads

    # Fuse the three projections: pre-transposed (E, 3E) weight, (1, 3E) bias.
    wqkv_t = jnp.concatenate([wq.T, wk.T, wv.T], axis=1).astype(x.dtype)
    bqkv = jnp.concatenate([bq, bk, bv]).reshape(1, 3 * E).astype(jnp.float32)

    kernel = functools.partial(_attn_kernel, num_heads=num_heads, head_dim=head_dim)

    grid_spec = pltpu.PrefetchScalarGridSpec(
        num_scalar_prefetch=0,
        grid=(B,),
        in_specs=[
            pl.BlockSpec((1, S, E), lambda b: (b, 0, 0)),      # x
            pl.BlockSpec((E, 3 * E), lambda b: (0, 0)),        # fused W_qkv^T (resident)
            pl.BlockSpec((1, 3 * E), lambda b: (0, 0)),        # fused bias (resident)
        ],
        out_specs=pl.BlockSpec((1, S, E), lambda b: (b, 0, 0)),
    )

    return pl.pallas_call(
        kernel,
        out_shape=jax.ShapeDtypeStruct((B, S, E), x.dtype),
        grid_spec=grid_spec,
        compiler_params=pltpu.CompilerParams(
            dimension_semantics=("parallel",)),                 # batch sharded across TCs (v7x)
    )(x, wqkv_t, bqkv)


def _reference(x, wq, bq, wk, bk, wv, bv, *, num_heads):
    B, S, E = x.shape
    Dh = E // num_heads
    q = (x @ wq.T + bq).reshape(B, S, num_heads, Dh).transpose(0, 2, 1, 3)
    k = (x @ wk.T + bk).reshape(B, S, num_heads, Dh).transpose(0, 2, 1, 3)
    v = (x @ wv.T + bv).reshape(B, S, num_heads, Dh).transpose(0, 2, 1, 3)
    scores = jnp.einsum("bhqd,bhkd->bhqk", q, k) / jnp.sqrt(jnp.float32(Dh))
    attn = jax.nn.softmax(scores, axis=-1)
    out = jnp.einsum("bhqk,bhkd->bhqd", attn, v)
    return out.transpose(0, 2, 1, 3).reshape(B, S, E)


if __name__ == "__main__":
    B, S, E, H = 2, 8, 32, 8   # embed_dim=32, num_heads=8 -> head_dim=4

    key = jax.random.PRNGKey(0)
    kx, kwq, kbq, kwk, kbk, kwv, kbv = jax.random.split(key, 7)

    x = jax.random.normal(kx, (B, S, E), dtype=jnp.float32)
    # Deterministic parameter init (PyTorch Linear weight shape: (out, in)).
    bound = 1.0 / math.sqrt(E)
    wq = jax.random.uniform(kwq, (E, E), jnp.float32, -bound, bound)
    bq = jax.random.uniform(kbq, (E,), jnp.float32, -bound, bound)
    wk = jax.random.uniform(kwk, (E, E), jnp.float32, -bound, bound)
    bk = jax.random.uniform(kbk, (E,), jnp.float32, -bound, bound)
    wv = jax.random.uniform(kwv, (E, E), jnp.float32, -bound, bound)
    bv = jax.random.uniform(kbv, (E,), jnp.float32, -bound, bound)

    out = scaled_dot_product_attention(x, wq, bq, wk, bk, wv, bv, num_heads=H)
    out = jax.block_until_ready(out)

    ref = _reference(x, wq, bq, wk, bk, wv, bv, num_heads=H)
    assert out.shape == (B, S, E)
    # Slightly relaxed tolerance: approx (EUP) reciprocal in the softmax denom.
    assert jnp.allclose(out, ref, atol=2e-3, rtol=2e-3), "mismatch vs reference"

    print("KERNEL_OK")
</pallas_src>

<mosaic_0001>
module attributes {stable_mosaic.version = 11 : i64} {
  func.func @_attn_kernel(%arg0: i32, %arg1: memref<1x8x32xf32, #tpu.memory_space<vmem>>, %arg2: memref<32x96xf32, #tpu.memory_space<vmem>>, %arg3: memref<1x96xf32, #tpu.memory_space<vmem>>, %arg4: memref<1x8x32xf32, #tpu.memory_space<vmem>>) attributes {dimension_semantics = [#tpu.dimension_semantics<parallel>], iteration_bounds = array<i64: 2>, scalar_prefetch = 0 : i64, scratch_operands = 0 : i64, tpu.core_type = #tpu.core_type<tc>, window_params = [{transform_indices = @transform_0, window_bounds = array<i64: 1, 8, 32>}, {pipeline_mode = #tpu.pipeline_mode<synchronous>, transform_indices = @transform_1, window_bounds = array<i64: 32, 96>}, {pipeline_mode = #tpu.pipeline_mode<synchronous>, transform_indices = @transform_2, window_bounds = array<i64: 1, 96>}, {transform_indices = @transform_3, window_bounds = array<i64: 1, 8, 32>}]} {
    %c0 = arith.constant 0 : index
    %c0_0 = arith.constant 0 : index
    %c0_1 = arith.constant 0 : index
    %0 = vector.load %arg1[%c0, %c0_0, %c0_1] : memref<1x8x32xf32, #tpu.memory_space<vmem>>, vector<1x8x32xf32>
    %1 = vector.shape_cast %0 : vector<1x8x32xf32> to vector<8x32xf32>
    %c0_2 = arith.constant 0 : index
    %c0_3 = arith.constant 0 : index
    %2 = vector.load %arg2[%c0_2, %c0_3] : memref<32x96xf32, #tpu.memory_space<vmem>>, vector<32x96xf32>
    %cst = arith.constant dense<0.000000e+00> : vector<8x96xf32>
    %3 = tpu.matmul %1, %2, %cst {dimension_numbers = #tpu.dot_dimension_numbers<[1], [0], [0], [1], [0, 0, 1, 1], [], []>} : vector<8x32xf32>, vector<32x96xf32>, vector<8x96xf32> -> vector<8x96xf32>
    %c0_4 = arith.constant 0 : index
    %c0_5 = arith.constant 0 : index
    %4 = vector.load %arg3[%c0_4, %c0_5] : memref<1x96xf32, #tpu.memory_space<vmem>>, vector<1x96xf32>
    %5 = vector.shape_cast %4 : vector<1x96xf32> to vector<96xf32>
    %6 = vector.shape_cast %5 : vector<96xf32> to vector<1x96xf32>
    %7 = vector.broadcast %6 : vector<1x96xf32> to vector<8x96xf32>
    %8 = arith.addf %3, %7 : vector<8x96xf32>
    %9 = vector.extract_strided_slice %8 {offsets = [0, 0], sizes = [8, 32], strides = [1, 1]} : vector<8x96xf32> to vector<8x32xf32>
    %cst_6 = arith.constant 5.000000e-01 : f32
    %10 = vector.broadcast %cst_6 : f32 to vector<8x32xf32>
    %11 = arith.mulf %9, %10 : vector<8x32xf32>
    %12 = vector.extract_strided_slice %8 {offsets = [0, 32], sizes = [8, 32], strides = [1, 1]} : vector<8x96xf32> to vector<8x32xf32>
    %13 = vector.extract_strided_slice %8 {offsets = [0, 64], sizes = [8, 32], strides = [1, 1]} : vector<8x96xf32> to vector<8x32xf32>
    %14 = vector.shape_cast %11 : vector<8x32xf32> to vector<8x8x4xf32>
    %15 = tpu.transpose %14, [1, 0, 2] : vector<8x8x4xf32> -> vector<8x8x4xf32>
    %16 = vector.shape_cast %12 : vector<8x32xf32> to vector<8x8x4xf32>
    %17 = tpu.transpose %16, [1, 0, 2] : vector<8x8x4xf32> -> vector<8x8x4xf32>
    %18 = vector.shape_cast %13 : vector<8x32xf32> to vector<8x8x4xf32>
    %19 = tpu.transpose %18, [1, 0, 2] : vector<8x8x4xf32> -> vector<8x8x4xf32>
    "tpu.trace_start"() <{level = 10 : i32, message = "hqd,hkd->hqk"}> : () -> ()
    %cst_7 = arith.constant dense<0.000000e+00> : vector<8x8x8xf32>
    %20 = tpu.matmul %15, %17, %cst_7 {dimension_numbers = #tpu.dot_dimension_numbers<[2], [2], [1], [1], [0, 0, 0, 1, 1, 1], [0], [0]>} : vector<8x8x4xf32>, vector<8x8x4xf32>, vector<8x8x8xf32> -> vector<8x8x8xf32>
    "tpu.trace_stop"() : () -> ()
    %cst_8 = arith.constant dense<0xFF800000> : vector<8x8xf32>
    %21 = vector.multi_reduction <maximumf>, %20, %cst_8 [2] : vector<8x8x8xf32> to vector<8x8xf32>
    %22 = vector.shape_cast %21 : vector<8x8xf32> to vector<8x8x1xf32>
    %23 = vector.broadcast %22 : vector<8x8x1xf32> to vector<8x8x8xf32>
    %24 = arith.subf %20, %23 : vector<8x8x8xf32>
    %25 = math.exp %24 : vector<8x8x8xf32>
    %cst_9 = arith.constant dense<0.000000e+00> : vector<8x8xf32>
    %26 = vector.multi_reduction <add>, %25, %cst_9 [2] : vector<8x8x8xf32> to vector<8x8xf32>
    %27 = vector.shape_cast %26 : vector<8x8xf32> to vector<8x8x1xf32>
    %28 = tpu.reciprocal %27 {approx = true} : vector<8x8x1xf32> -> vector<8x8x1xf32>
    %29 = vector.broadcast %28 : vector<8x8x1xf32> to vector<8x8x8xf32>
    %30 = arith.mulf %25, %29 : vector<8x8x8xf32>
    "tpu.trace_start"() <{level = 10 : i32, message = "hqk,hkd->hqd"}> : () -> ()
    %cst_10 = arith.constant dense<0.000000e+00> : vector<8x8x4xf32>
    %31 = tpu.matmul %30, %19, %cst_10 {dimension_numbers = #tpu.dot_dimension_numbers<[2], [1], [1], [2], [0, 0, 0, 1, 1, 2], [0], [0]>} : vector<8x8x8xf32>, vector<8x8x4xf32>, vector<8x8x4xf32> -> vector<8x8x4xf32>
    "tpu.trace_stop"() : () -> ()
    %32 = tpu.transpose %31, [1, 0, 2] : vector<8x8x4xf32> -> vector<8x8x4xf32>
    %33 = vector.shape_cast %32 : vector<8x8x4xf32> to vector<8x32xf32>
    %c0_11 = arith.constant 0 : index
    %c0_12 = arith.constant 0 : index
    %c0_13 = arith.constant 0 : index
    %34 = vector.load %arg4[%c0_11, %c0_12, %c0_13] : memref<1x8x32xf32, #tpu.memory_space<vmem>>, vector<1x8x32xf32>
    %35 = vector.shape_cast %34 : vector<1x8x32xf32> to vector<8x32xf32>
    %36 = vector.shape_cast %33 : vector<8x32xf32> to vector<1x8x32xf32>
    tpu.vector_store %arg4[%c0_11, %c0_12, %c0_13], %36 {strides = array<i32>} : memref<1x8x32xf32, #tpu.memory_space<vmem>>, vector<1x8x32xf32>,
    return
  }
  func.func @transform_0(%arg0: i32) -> (i32, i32, i32) {
    %c0_i32 = arith.constant 0 : i32
    %c0_i32_0 = arith.constant 0 : i32
    %c0_i32_1 = arith.constant 0 : i32
    return %arg0, %c0_i32, %c0_i32_0 : i32, i32, i32
  }
  func.func @transform_1(%arg0: i32) -> (i32, i32) {
    %c0_i32 = arith.constant 0 : i32
    %c0_i32_0 = arith.constant 0 : i32
    %c0_i32_1 = arith.constant 0 : i32
    return %c0_i32, %c0_i32_0 : i32, i32
  }
  func.func @transform_2(%arg0: i32) -> (i32, i32) {
    %c0_i32 = arith.constant 0 : i32
    %c0_i32_0 = arith.constant 0 : i32
    %c0_i32_1 = arith.constant 0 : i32
    return %c0_i32, %c0_i32_0 : i32, i32
  }
  func.func @transform_3(%arg0: i32) -> (i32, i32, i32) {
    %c0_i32 = arith.constant 0 : i32
    %c0_i32_0 = arith.constant 0 : i32
    %c0_i32_1 = arith.constant 0 : i32
    return %arg0, %c0_i32, %c0_i32_0 : i32, i32, i32
  }
}

</mosaic_0001>

<llo_original>
// kernel: tpu_custom_call.1
$region0: #{tpu_custom_call.1}
  #allocation0 [shape = 'u32[]', space=smem, size = 0x4, offset = 0x4, fixed_abs, tag = 'smem constant byte address 0x4 - core index']
  #allocation1 [shape = 'u32[72,128]{1,0:T(1,128)}', space=vmem, size = 0x9000, scoped, tag = 'internal scratch']
  %s0 = inlined_call_operand.hbm [shape: f32[2,8,32], index: 0, kind: input, shape index: {}]
  %s1 = inlined_call_operand.hbm [shape: f32[32,96], index: 1, kind: input, shape index: {}]
  %s2 = inlined_call_operand.vmem [shape: f32[1,96], index: 2, kind: input, shape index: {}]
  %s3 = inlined_call_operand.hbm [shape: f32[2,8,32], index: 3, kind: output, shape index: {}]
  %s4 = sld [smem:[#allocation0]]
  $region53: #{tpu_custom_call.1} parent=0
    _
  %s6 = ssub.s32 1, %s4
  %s7 = scalar_select 0, %s6, %s4
  $region1: #{tpu_custom_call.1} parent=0
    #allocation2 [shape = 'u8[8192]{0}', space=vmem, size = 0x2000, scoped, tag = 'input window, operand 0']
    #allocation3 [shape = 's32[2]{0}', space=sflag, size = 0x8, scoped, tag = 'scoped memory for tpu_custom_call.1']
    #allocation4 [shape = 's32[2]{0}', space=sflag, size = 0x8, scoped, tag = 'scoped memory for tpu_custom_call.1']
    #allocation5 [shape = 'u8[16384]{0}', space=vmem, size = 0x4000, scoped, tag = 'input window, operand 1, single buffered']
    #allocation6 [shape = 's32[1]{0}', space=sflag, size = 0x4, scoped, tag = 'scoped memory for tpu_custom_call.1']
    #allocation7 [shape = 'u8[8192]{0}', space=vmem, size = 0x2000, scoped, tag = 'output window, operand 0']
    %8 = vsyncpa [#allocation3], 0
    %s9 = scalar_lea.sflag [#allocation3], 1
    %10 = vsyncpa %s9, 0
    %11 = vsyncpa [#allocation6], 0
    %12 = vsyncpa [#allocation4], 0
    %s13 = scalar_lea.sflag [#allocation4], 1
    %14 = vsyncpa %s13, 0
    loop: start=0, step=1, limit=4
    $region2: #{tpu_custom_call.1} parent=1 // loop_pre_header
      _
    $region3: #{tpu_custom_call.1} parent=1 // loop_header
      %s16 = sphi 0, %s20
      %p17 = scmp.ge.s32.totalorder %s16, 4
      %s26 = sphi 0, %s28
      %s29 = sphi 0, %s26
      %s30 = sphi 0, %s29
      %s46 = sphi 0, %s30
      %s50 = sphi 0, %s50
      %s52 = sphi 0, %s50
      %s53 = sphi 0, %s52
      %s67 = sphi 0, %s53
      %s71 = sphi 0, %s71
      %s73 = sphi 0, %s71
      %s74 = sphi 0, %s73
      %s88 = sphi 0, %s74
      %s94 = sphi 0, %s96
      %s97 = sphi 0, %s94
      %s98 = sphi 0, %s97
      %s114 = sphi 0, %s98
    $region4: #{tpu_custom_call.1} parent=1 // loop_header_branch
      %19 = sbr.rel (%p17) target = $region8
    $region5: #{tpu_custom_call.1} parent=1 // loop_body
      %s21 = ssub.s32 %s16, 1
      %s22 = ssub.s32 %s16, 2
      %s23 = sadd.s32 %s16, 1
      %s24 = ssub.s32 %s16, %s23
      %p25 = scmp.eq.s32.totalorder %s24, 0
      %s27 = sadd.s32 %s26, 1
      %s28 = scalar_select %p25, %s26, %s27
      %p31 = pneg %p25
      %p32 = scmp.eq.s32.totalorder %s16, 1
      %p33 = por %p31, %p32
      %p34 = scmp.ne.s32.totalorder %s26, %s29
      %p35 = scmp.eq.s32.totalorder %s16, 0
      %p36 = por %p34, %p35
      %p37 = scmp.ne.s32.totalorder %s26, %s29
      %p38 = scmp.eq.s32.totalorder %s21, 1
      %p39 = por %p37, %p38
      %p40 = scmp.ne.s32.totalorder %s29, %s30
      %p41 = scmp.eq.s32.totalorder %s21, 0
      %p42 = por %p40, %p41
      %p43 = scmp.ne.s32.totalorder %s29, %s30
      %p44 = scmp.eq.s32.totalorder %s22, 1
      %p45 = por %p43, %p44
      %p47 = scmp.ne.s32.totalorder %s30, %s46
      %p48 = scmp.eq.s32.totalorder %s22, 0
      %p49 = por %p47, %p48
      %s51 = sadd.s32 %s50, 1
      %p54 = scmp.eq.s32.totalorder %s16, 1
      %p55 = scmp.ne.s32.totalorder %s50, %s52
      %p56 = scmp.eq.s32.totalorder %s16, 0
      %p57 = por %p55, %p56
      %p58 = scmp.ne.s32.totalorder %s50, %s52
      %p59 = scmp.eq.s32.totalorder %s21, 1
      %p60 = por %p58, %p59
      %p61 = scmp.ne.s32.totalorder %s52, %s53
      %p62 = scmp.eq.s32.totalorder %s21, 0
      %p63 = por %p61, %p62
      %p64 = scmp.ne.s32.totalorder %s52, %s53
      %p65 = scmp.eq.s32.totalorder %s22, 1
      %p66 = por %p64, %p65
      %p68 = scmp.ne.s32.totalorder %s53, %s67
      %p69 = scmp.eq.s32.totalorder %s22, 0
      %p70 = por %p68, %p69
      %s72 = sadd.s32 %s71, 1
      %p75 = scmp.eq.s32.totalorder %s16, 1
      %p76 = scmp.ne.s32.totalorder %s71, %s73
      %p77 = scmp.eq.s32.totalorder %s16, 0
      %p78 = por %p76, %p77
      %p79 = scmp.ne.s32.totalorder %s71, %s73
      %p80 = scmp.eq.s32.totalorder %s21, 1
      %p81 = por %p79, %p80
      %p82 = scmp.ne.s32.totalorder %s73, %s74
      %p83 = scmp.eq.s32.totalorder %s21, 0
      %p84 = por %p82, %p83
      %p85 = scmp.ne.s32.totalorder %s73, %s74
      %p86 = scmp.eq.s32.totalorder %s22, 1
      %p87 = por %p85, %p86
      %p89 = scmp.ne.s32.totalorder %s74, %s88
      %p90 = scmp.eq.s32.totalorder %s22, 0
      %p91 = por %p89, %p90
      %s92 = ssub.s32 %s16, %s23
      %p93 = scmp.eq.s32.totalorder %s92, 0
      %s95 = sadd.s32 %s94, 1
      %s96 = scalar_select %p93, %s94, %s95
      %p99 = pneg %p93
      %p100 = scmp.eq.s32.totalorder %s16, 1
      %p101 = por %p99, %p100
      %p102 = scmp.ne.s32.totalorder %s94, %s97
      %p103 = scmp.eq.s32.totalorder %s16, 0
      %p104 = por %p102, %p103
      %p105 = scmp.ne.s32.totalorder %s94, %s97
      %p106 = scmp.eq.s32.totalorder %s21, 1
      %p107 = por %p105, %p106
      %p108 = scmp.ne.s32.totalorder %s97, %s98
      %p109 = scmp.eq.s32.totalorder %s21, 0
      %p110 = por %p108, %p109
      %p111 = scmp.ne.s32.totalorder %s97, %s98
      %p112 = scmp.eq.s32.totalorder %s22, 1
      %p113 = por %p111, %p112
      %p115 = scmp.ne.s32.totalorder %s98, %s114
      %p116 = scmp.eq.s32.totalorder %s22, 0
      %p117 = por %p115, %p116
      %p118 = scmp.le.s32.totalorder 1, %s16
      %p119 = scmp.lt.s32.totalorder %s16, 3
      %p120 = pnand %p118, %p119
      %p121 = pneg %p120
      // Predicated region
      $region9: #{tpu_custom_call.1} parent=5 // pred_check
        _
      $region10: #{tpu_custom_call.1} parent=5 // pred_check_branch
        %123 = sbr.rel (%p120) target = $region12
      $region11: #{tpu_custom_call.1} parent=5 // pred_region
        %s124 = ssub.s32 %s16, 1
        // Predicated region
        $region13: #{tpu_custom_call.1} parent=11 // pred_check
          %p125 = pneg %p63
        $region14: #{tpu_custom_call.1} parent=11 // pred_check_branch
          %127 = sbr.rel (%p125) target = $region16
        $region15: #{tpu_custom_call.1} parent=11 // pred_region
          %129 = vsyncadd [#allocation6], 0
          %s130 = sshll.u32 %s1, 4
          %s131 = int_to_ptr.hbm [resolvable:$true] %s130
          %s132 = sshll.u32 [#allocation5], 4
          %s133 = int_to_ptr.vmem [resolvable:$true] %s132
          %138 = dma.hbm_to_vmem [thread:$0]  %s131, 512, %s133, [#allocation6], 128, 128, 8
        $region16: #{tpu_custom_call.1} parent=11 // pred_fallthru
          _
        // Predicated region
        $region17: #{tpu_custom_call.1} parent=11 // pred_check
          %p139 = pneg %p84
        $region18: #{tpu_custom_call.1} parent=11 // pred_check_branch
          %141 = sbr.rel (%p139) target = $region20
        $region19: #{tpu_custom_call.1} parent=11 // pred_region
          _
        $region20: #{tpu_custom_call.1} parent=11 // pred_fallthru
          _
      $region12: #{tpu_custom_call.1} parent=5 // pred_fallthru
        _
      %p142 = scmp.lt.s32.totalorder %s16, 2
      // Predicated region
      $region21: #{tpu_custom_call.1} parent=5 // pred_check
        %p143 = pneg %p142
      $region22: #{tpu_custom_call.1} parent=5 // pred_check_branch
        %145 = sbr.rel (%p143) target = $region24
      $region23: #{tpu_custom_call.1} parent=5 // pred_region
        // Predicated region
        $region25: #{tpu_custom_call.1} parent=23 // pred_check
          %p146 = pneg %p36
        $region26: #{tpu_custom_call.1} parent=23 // pred_check_branch
          %148 = sbr.rel (%p146) target = $region28
        $region27: #{tpu_custom_call.1} parent=23 // pred_region
          %s149 = sand.u32 %s26, 1
          %s150 = scalar_lea.sflag [#allocation3], %s149
          %s151 = sand.u32 %s26, 1
          %s152 = smul.addr %s151, 8
          %s153 = scalar_lea.vmem [#allocation2], %s152
          %155 = vsyncadd %s150, 0
          %s156 = smul.addr %s16, 8
          %s157 = scalar_lea.hbm %s0, %s156
          %s159 = sshll.u32 %s157, 4
          %s160 = int_to_ptr.hbm [resolvable:$true] %s159
          %s161 = sshll.u32 %s153, 4
          %s162 = int_to_ptr.vmem [resolvable:$true] %s161
          %164 = dma.hbm_to_vmem [thread:$0]  %s160, 128, %s162, %s150
        $region28: #{tpu_custom_call.1} parent=23 // pred_fallthru
          _
      $region24: #{tpu_custom_call.1} parent=5 // pred_fallthru
        _
      %p165 = scmp.le.s32.totalorder 1, %s16
      %p166 = scmp.lt.s32.totalorder %s16, 3
      %p167 = pnand %p165, %p166
      %p168 = pneg %p167
      // Predicated region
      $region29: #{tpu_custom_call.1} parent=5 // pred_check
        _
      $region30: #{tpu_custom_call.1} parent=5 // pred_check_branch
        %170 = sbr.rel (%p167) target = $region32
      $region31: #{tpu_custom_call.1} parent=5 // pred_region
        %s171 = ssub.s32 %s16, 1
        %s172 = sand.u32 %s29, 1
        %s173 = scalar_lea.sflag [#allocation3], %s172
        %s174 = sand.u32 %s29, 1
        %s175 = smul.addr %s174, 8
        %s176 = scalar_lea.vmem [#allocation2], %s175
        // Predicated region
        $region33: #{tpu_custom_call.1} parent=31 // pred_check
          %p177 = pneg %p42
        $region34: #{tpu_custom_call.1} parent=31 // pred_check_branch
          %179 = sbr.rel (%p177) target = $region36
        $region35: #{tpu_custom_call.1} parent=31 // pred_region
          %181 = dma.done %s173, 128
        $region36: #{tpu_custom_call.1} parent=31 // pred_fallthru
          _
        // Predicated region
        $region37: #{tpu_custom_call.1} parent=31 // pred_check
          %p182 = pneg %p63
        $region38: #{tpu_custom_call.1} parent=31 // pred_check_branch
          %184 = sbr.rel (%p182) target = $region40
        $region39: #{tpu_custom_call.1} parent=31 // pred_region
          %186 = dma.done [#allocation6], 512
        $region40: #{tpu_custom_call.1} parent=31 // pred_fallthru
          _
        %s187 = sand.u32 %s29, 1
        %s188 = scalar_lea.sflag [#allocation3], %s187
        %s189 = sand.u32 %s29, 1
        %s190 = smul.addr %s189, 8
        %s191 = scalar_lea.vmem [#allocation2], %s190
        %p192 = pneg %p42
        %p193 = pneg %p39
        %p194 = pneg %p63
        %p195 = pneg %p60
        %p196 = pneg %p84
        %p197 = pneg %p81
        %p198 = pneg %p110
        %p199 = pneg %p107
        %s200 = sand.u32 %s97, 1
        %s201 = scalar_lea.sflag [#allocation4], %s200
        %s202 = sand.u32 %s97, 1
        %s203 = smul.addr %s202, 8
        %s204 = scalar_lea.vmem [#allocation7], %s203
        %v205 = vld [vmem:[%s176] sm:$0xff]
        %v206 = vld [vmem:[#allocation5] sm:$0xff]
        %v207 = vld [vmem:[#allocation5 + $0x8] sm:$0xff]
        %v208 = vld [vmem:[#allocation5 + $0x10] sm:$0xff]
        %v209 = vld [vmem:[#allocation5 + $0x18] sm:$0xff]
        %v210 = vld [vmem:[%s2] sm:$0x1]
        %v212 = vperm.slane %v210, 0
        %vm214 = vcmask 261120
        %v216 = vsel %vm214, %v205, 0
        %218 = vmatpush.msra.mxu0 0.0
        %219 = vmatpush.msra.mxu0 0.0
        %220 = vmatpush.msra.mxu0 0.0
        %221 = vmatpush.msra.mxu0 0.0
        %222 = vmatpush.msra.mxu0 0.0
        %223 = vmatpush.msra.mxu0 0.0
        %224 = vmatpush.msra.mxu0 0.0
        %225 = vmatpush.msra.mxu0 0.0
        %226 = vmatpush.msra.mxu0 0.0
        %227 = vmatpush.msra.mxu0 0.0
        %228 = vmatpush.msra.mxu0 0.0
        %229 = vmatpush.msra.mxu0 0.0
        %230 = vmatpush.msra.mxu0 %v209
        %231 = vmatpush.msra.mxu0 %v208
        %232 = vmatpush.msra.mxu0 %v207
        %233 = vmatpush.msra.mxu0 %v206
        %234 = vmatmul.f32.gmra.mxu0 %v216
        %v235 = vpop.f32.mrf.mxu0
        %v236 = vadd.f32 %v212, %v235
        %237 = vdwg.mxu0
        %v238 = vmul.f32 %v236, 0.5
        %240 = vrot.lane.b32.xlu0 %v238, 124
        %v241 = vpop.permute.xlu0 %240
        %243 = vrot.lane.b32.xlu0 %v238, 120
        %v244 = vpop.permute.xlu0 %243
        %246 = vrot.lane.b32.xlu0 %v238, 116
        %v247 = vpop.permute.xlu0 %246
        %249 = vrot.lane.b32.xlu0 %v238, 112
        %v250 = vpop.permute.xlu0 %249
        %252 = vrot.lane.b32.xlu0 %v238, 108
        %v253 = vpop.permute.xlu0 %252
        %255 = vrot.lane.b32.xlu0 %v238, 104
        %v256 = vpop.permute.xlu0 %255
        %258 = vrot.lane.b32.xlu0 %v238, 100
        %v259 = vpop.permute.xlu0 %258
        %v261 = vrot.slane %v244, 4
        %vm262 = vcmask 1047556
        %v263 = vsel %vm262, %v261, %v238
        %v264 = vrot.slane %v238, 4
        %v265 = vsel %vm262, %v244, %v264
        %v267 = vunpack.c.l.s4 1983009808
        %v268 = vunpack.c.0.s8 %v267
        %v269 = vperm.slane %v263, %v268
        %v271 = vunpack.c.l.s4 1983009808
        %v272 = vunpack.c.0.s8 %v271
        %v273 = vperm.slane %v265, %v272
        %v274 = vrot.slane %v247, 4
        %v275 = vsel %vm262, %v274, %v241
        %v276 = vrot.slane %v241, 4
        %v277 = vsel %vm262, %v247, %v276
        %v279 = vunpack.c.l.s4 1983009808
        %v280 = vunpack.c.0.s8 %v279
        %v281 = vperm.slane %v275, %v280
        %v283 = vunpack.c.l.s4 1983009808
        %v284 = vunpack.c.0.s8 %v283
        %v285 = vperm.slane %v277, %v284
        %v286 = vrot.slane %v256, 4
        %v287 = vsel %vm262, %v286, %v250
        %v288 = vrot.slane %v250, 4
        %v289 = vsel %vm262, %v256, %v288
        %v291 = vunpack.c.l.s4 1983009808
        %v292 = vunpack.c.0.s8 %v291
        %v293 = vperm.slane %v287, %v292
        %v295 = vunpack.c.l.s4 1983009808
        %v296 = vunpack.c.0.s8 %v295
        %v297 = vperm.slane %v289, %v296
        %v298 = vrot.slane %v259, 4
        %v299 = vsel %vm262, %v298, %v253
        %v300 = vrot.slane %v253, 4
        %v301 = vsel %vm262, %v259, %v300
        %v303 = vunpack.c.l.s4 1983009808
        %v304 = vunpack.c.0.s8 %v303
        %v305 = vperm.slane %v299, %v304
        %v307 = vunpack.c.l.s4 1983009808
        %v308 = vunpack.c.0.s8 %v307
        %v309 = vperm.slane %v301, %v308
        %v310 = vrot.slane %v281, 4
        %v311 = vsel %vm262, %v310, %v269
        %v312 = vrot.slane %v269, 4
        %v313 = vsel %vm262, %v281, %v312
        %v315 = vunpack.c.l.s4 1934713408
        %v316 = vunpack.c.0.s8 %v315
        %v317 = vperm.slane %v311, %v316
        %v319 = vunpack.c.l.s4 1934713408
        %v320 = vunpack.c.0.s8 %v319
        %v321 = vperm.slane %v313, %v320
        %v322 = vrot.slane %v285, 4
        %v323 = vsel %vm262, %v322, %v273
        %v324 = vrot.slane %v273, 4
        %v325 = vsel %vm262, %v285, %v324
        %v327 = vunpack.c.l.s4 1934713408
        %v328 = vunpack.c.0.s8 %v327
        %v329 = vperm.slane %v323, %v328
        %v331 = vunpack.c.l.s4 1934713408
        %v332 = vunpack.c.0.s8 %v331
        %v333 = vperm.slane %v325, %v332
        %v334 = vrot.slane %v305, 4
        %v335 = vsel %vm262, %v334, %v293
        %v336 = vrot.slane %v293, 4
        %v337 = vsel %vm262, %v305, %v336
        %v339 = vunpack.c.l.s4 1934713408
        %v340 = vunpack.c.0.s8 %v339
        %v341 = vperm.slane %v335, %v340
        %v343 = vunpack.c.l.s4 1934713408
        %v344 = vunpack.c.0.s8 %v343
        %v345 = vperm.slane %v337, %v344
        %v346 = vrot.slane %v309, 4
        %v347 = vsel %vm262, %v346, %v297
        %v348 = vrot.slane %v297, 4
        %v349 = vsel %vm262, %v309, %v348
        %v351 = vunpack.c.l.s4 1934713408
        %v352 = vunpack.c.0.s8 %v351
        %v353 = vperm.slane %v347, %v352
        %v355 = vunpack.c.l.s4 1934713408
        %v356 = vunpack.c.0.s8 %v355
        %v357 = vperm.slane %v349, %v356
        %v358 = vrot.slane %v341, 4
        %v359 = vsel %vm262, %v358, %v317
        %v360 = vrot.slane %v317, 4
        %v361 = vsel %vm262, %v341, %v360
        %v362 = vrot.slane %v345, 4
        %v363 = vsel %vm262, %v362, %v321
        %v364 = vrot.slane %v321, 4
        %v365 = vsel %vm262, %v345, %v364
        %v366 = vrot.slane %v353, 4
        %v367 = vsel %vm262, %v366, %v329
        %v368 = vrot.slane %v329, 4
        %v369 = vsel %vm262, %v353, %v368
        %v370 = vrot.slane %v357, 4
        %v371 = vsel %vm262, %v370, %v333
        %v372 = vrot.slane %v333, 4
        %v373 = vsel %vm262, %v357, %v372
        %v374 = vrot.slane %v363, 4
        %v375 = vsel %vm262, %v374, %v359
        %v376 = vrot.slane %v359, 4
        %v377 = vsel %vm262, %v363, %v376
        %v379 = vunpack.c.l.s4 1983009808
        %v380 = vunpack.c.0.s8 %v379
        %v381 = vperm.slane %v375, %v380
        %v383 = vunpack.c.l.s4 1983009808
        %v384 = vunpack.c.0.s8 %v383
        %v385 = vperm.slane %v377, %v384
        %v386 = vrot.slane %v365, 4
        %v387 = vsel %vm262, %v386, %v361
        %v388 = vrot.slane %v361, 4
        %v389 = vsel %vm262, %v365, %v388
        %v391 = vunpack.c.l.s4 1983009808
        %v392 = vunpack.c.0.s8 %v391
        %v393 = vperm.slane %v387, %v392
        %v395 = vunpack.c.l.s4 1983009808
        %v396 = vunpack.c.0.s8 %v395
        %v397 = vperm.slane %v389, %v396
        %v398 = vrot.slane %v371, 4
        %v399 = vsel %vm262, %v398, %v367
        %v400 = vrot.slane %v367, 4
        %v401 = vsel %vm262, %v371, %v400
        %v403 = vunpack.c.l.s4 1983009808
        %v404 = vunpack.c.0.s8 %v403
        %v405 = vperm.slane %v399, %v404
        %v407 = vunpack.c.l.s4 1983009808
        %v408 = vunpack.c.0.s8 %v407
        %v409 = vperm.slane %v401, %v408
        %v410 = vrot.slane %v373, 4
        %v411 = vsel %vm262, %v410, %v369
        %v412 = vrot.slane %v369, 4
        %v413 = vsel %vm262, %v373, %v412
        %v415 = vunpack.c.l.s4 1983009808
        %v416 = vunpack.c.0.s8 %v415
        %v417 = vperm.slane %v411, %v416
        %v419 = vunpack.c.l.s4 1983009808
        %v420 = vunpack.c.0.s8 %v419
        %v421 = vperm.slane %v413, %v420
        %v422 = vrot.slane %v393, 4
        %v423 = vsel %vm262, %v422, %v381
        %v424 = vrot.slane %v381, 4
        %v425 = vsel %vm262, %v393, %v424
        %v427 = vunpack.c.l.s4 1934713408
        %v428 = vunpack.c.0.s8 %v427
        %v429 = vperm.slane %v423, %v428
        %v431 = vunpack.c.l.s4 1934713408
        %v432 = vunpack.c.0.s8 %v431
        %v433 = vperm.slane %v425, %v432
        %v434 = vrot.slane %v397, 4
        %v435 = vsel %vm262, %v434, %v385
        %v436 = vrot.slane %v385, 4
        %v437 = vsel %vm262, %v397, %v436
        %v439 = vunpack.c.l.s4 1934713408
        %v440 = vunpack.c.0.s8 %v439
        %v441 = vperm.slane %v435, %v440
        %v443 = vunpack.c.l.s4 1934713408
        %v444 = vunpack.c.0.s8 %v443
        %v445 = vperm.slane %v437, %v444
        %v446 = vrot.slane %v417, 4
        %v447 = vsel %vm262, %v446, %v405
        %v448 = vrot.slane %v405, 4
        %v449 = vsel %vm262, %v417, %v448
        %v451 = vunpack.c.l.s4 1934713408
        %v452 = vunpack.c.0.s8 %v451
        %v453 = vperm.slane %v447, %v452
        %v455 = vunpack.c.l.s4 1934713408
        %v456 = vunpack.c.0.s8 %v455
        %v457 = vperm.slane %v449, %v456
        %v458 = vrot.slane %v421, 4
        %v459 = vsel %vm262, %v458, %v409
        %v460 = vrot.slane %v409, 4
        %v461 = vsel %vm262, %v421, %v460
        %v463 = vunpack.c.l.s4 1934713408
        %v464 = vunpack.c.0.s8 %v463
        %v465 = vperm.slane %v459, %v464
        %v467 = vunpack.c.l.s4 1934713408
        %v468 = vunpack.c.0.s8 %v467
        %v469 = vperm.slane %v461, %v468
        %v470 = vrot.slane %v453, 4
        %v471 = vsel %vm262, %v470, %v429
        %v472 = vrot.slane %v429, 4
        %v473 = vsel %vm262, %v453, %v472
        %v474 = vrot.slane %v457, 4
        %v475 = vsel %vm262, %v474, %v433
        %v476 = vrot.slane %v433, 4
        %v477 = vsel %vm262, %v457, %v476
        %v478 = vrot.slane %v465, 4
        %v479 = vsel %vm262, %v478, %v441
        %v480 = vrot.slane %v441, 4
        %v481 = vsel %vm262, %v465, %v480
        %v482 = vrot.slane %v469, 4
        %v483 = vsel %vm262, %v482, %v445
        %v484 = vrot.slane %v445, 4
        %v485 = vsel %vm262, %v469, %v484
        %487 = vrot.lane.b32.xlu0 %v236, 124
        %v488 = vpop.permute.xlu0 %487
        %489 = vrot.lane.b32.xlu0 %v236, 120
        %v490 = vpop.permute.xlu0 %489
        %491 = vrot.lane.b32.xlu0 %v236, 116
        %v492 = vpop.permute.xlu0 %491
        %493 = vrot.lane.b32.xlu0 %v236, 112
        %v494 = vpop.permute.xlu0 %493
        %495 = vrot.lane.b32.xlu0 %v236, 108
        %v496 = vpop.permute.xlu0 %495
        %497 = vrot.lane.b32.xlu0 %v236, 104
        %v498 = vpop.permute.xlu0 %497
        %499 = vrot.lane.b32.xlu0 %v236, 100
        %v500 = vpop.permute.xlu0 %499
        %501 = vrot.lane.b32.xlu0 %v236, 96
        %v502 = vpop.permute.xlu0 %501
        %503 = vrot.lane.b32.xlu0 %v488, 96
        %v504 = vpop.permute.xlu0 %503
        %505 = vrot.lane.b32.xlu0 %v490, 96
        %v506 = vpop.permute.xlu0 %505
        %507 = vrot.lane.b32.xlu0 %v492, 96
        %v508 = vpop.permute.xlu0 %507
        %509 = vrot.lane.b32.xlu0 %v494, 96
        %v510 = vpop.permute.xlu0 %509
        %511 = vrot.lane.b32.xlu0 %v496, 96
        %v512 = vpop.permute.xlu0 %511
        %513 = vrot.lane.b32.xlu0 %v498, 96
        %v514 = vpop.permute.xlu0 %513
        %515 = vrot.lane.b32.xlu0 %v500, 96
        %v516 = vpop.permute.xlu0 %515
        %v525 = vrot.slane %v506, 4
        %v526 = vsel %vm262, %v525, %v502
        %v527 = vrot.slane %v502, 4
        %v528 = vsel %vm262, %v506, %v527
        %v530 = vunpack.c.l.s4 1983009808
        %v531 = vunpack.c.0.s8 %v530
        %v532 = vperm.slane %v526, %v531
        %v534 = vunpack.c.l.s4 1983009808
        %v535 = vunpack.c.0.s8 %v534
        %v536 = vperm.slane %v528, %v535
        %v537 = vrot.slane %v508, 4
        %v538 = vsel %vm262, %v537, %v504
        %v539 = vrot.slane %v504, 4
        %v540 = vsel %vm262, %v508, %v539
        %v542 = vunpack.c.l.s4 1983009808
        %v543 = vunpack.c.0.s8 %v542
        %v544 = vperm.slane %v538, %v543
        %v546 = vunpack.c.l.s4 1983009808
        %v547 = vunpack.c.0.s8 %v546
        %v548 = vperm.slane %v540, %v547
        %v549 = vrot.slane %v514, 4
        %v550 = vsel %vm262, %v549, %v510
        %v551 = vrot.slane %v510, 4
        %v552 = vsel %vm262, %v514, %v551
        %v554 = vunpack.c.l.s4 1983009808
        %v555 = vunpack.c.0.s8 %v554
        %v556 = vperm.slane %v550, %v555
        %v558 = vunpack.c.l.s4 1983009808
        %v559 = vunpack.c.0.s8 %v558
        %v560 = vperm.slane %v552, %v559
        %v561 = vrot.slane %v516, 4
        %v562 = vsel %vm262, %v561, %v512
        %v563 = vrot.slane %v512, 4
        %v564 = vsel %vm262, %v516, %v563
        %v566 = vunpack.c.l.s4 1983009808
        %v567 = vunpack.c.0.s8 %v566
        %v568 = vperm.slane %v562, %v567
        %v570 = vunpack.c.l.s4 1983009808
        %v571 = vunpack.c.0.s8 %v570
        %v572 = vperm.slane %v564, %v571
        %v573 = vrot.slane %v544, 4
        %v574 = vsel %vm262, %v573, %v532
        %v575 = vrot.slane %v532, 4
        %v576 = vsel %vm262, %v544, %v575
        %v578 = vunpack.c.l.s4 1934713408
        %v579 = vunpack.c.0.s8 %v578
        %v580 = vperm.slane %v574, %v579
        %v582 = vunpack.c.l.s4 1934713408
        %v583 = vunpack.c.0.s8 %v582
        %v584 = vperm.slane %v576, %v583
        %v585 = vrot.slane %v548, 4
        %v586 = vsel %vm262, %v585, %v536
        %v587 = vrot.slane %v536, 4
        %v588 = vsel %vm262, %v548, %v587
        %v590 = vunpack.c.l.s4 1934713408
        %v591 = vunpack.c.0.s8 %v590
        %v592 = vperm.slane %v586, %v591
        %v594 = vunpack.c.l.s4 1934713408
        %v595 = vunpack.c.0.s8 %v594
        %v596 = vperm.slane %v588, %v595
        %v597 = vrot.slane %v568, 4
        %v598 = vsel %vm262, %v597, %v556
        %v599 = vrot.slane %v556, 4
        %v600 = vsel %vm262, %v568, %v599
        %v602 = vunpack.c.l.s4 1934713408
        %v603 = vunpack.c.0.s8 %v602
        %v604 = vperm.slane %v598, %v603
        %v606 = vunpack.c.l.s4 1934713408
        %v607 = vunpack.c.0.s8 %v606
        %v608 = vperm.slane %v600, %v607
        %v609 = vrot.slane %v572, 4
        %v610 = vsel %vm262, %v609, %v560
        %v611 = vrot.slane %v560, 4
        %v612 = vsel %vm262, %v572, %v611
        %v614 = vunpack.c.l.s4 1934713408
        %v615 = vunpack.c.0.s8 %v614
        %v616 = vperm.slane %v610, %v615
        %v618 = vunpack.c.l.s4 1934713408
        %v619 = vunpack.c.0.s8 %v618
        %v620 = vperm.slane %v612, %v619
        %v621 = vrot.slane %v604, 4
        %v622 = vsel %vm262, %v621, %v580
        %v623 = vrot.slane %v580, 4
        %v624 = vsel %vm262, %v604, %v623
        %v625 = vrot.slane %v608, 4
        %v626 = vsel %vm262, %v625, %v584
        %v627 = vrot.slane %v584, 4
        %v628 = vsel %vm262, %v608, %v627
        %v629 = vrot.slane %v616, 4
        %v630 = vsel %vm262, %v629, %v592
        %v631 = vrot.slane %v592, 4
        %v632 = vsel %vm262, %v616, %v631
        %v633 = vrot.slane %v620, 4
        %v634 = vsel %vm262, %v633, %v596
        %v635 = vrot.slane %v596, 4
        %v636 = vsel %vm262, %v620, %v635
        %v637 = vrot.slane %v626, 4
        %v638 = vsel %vm262, %v637, %v622
        %v639 = vrot.slane %v622, 4
        %v640 = vsel %vm262, %v626, %v639
        %v642 = vunpack.c.l.s4 1983009808
        %v643 = vunpack.c.0.s8 %v642
        %v644 = vperm.slane %v638, %v643
        %v646 = vunpack.c.l.s4 1983009808
        %v647 = vunpack.c.0.s8 %v646
        %v648 = vperm.slane %v640, %v647
        %v649 = vrot.slane %v628, 4
        %v650 = vsel %vm262, %v649, %v624
        %v651 = vrot.slane %v624, 4
        %v652 = vsel %vm262, %v628, %v651
        %v654 = vunpack.c.l.s4 1983009808
        %v655 = vunpack.c.0.s8 %v654
        %v656 = vperm.slane %v650, %v655
        %v658 = vunpack.c.l.s4 1983009808
        %v659 = vunpack.c.0.s8 %v658
        %v660 = vperm.slane %v652, %v659
        %v661 = vrot.slane %v634, 4
        %v662 = vsel %vm262, %v661, %v630
        %v663 = vrot.slane %v630, 4
        %v664 = vsel %vm262, %v634, %v663
        %v666 = vunpack.c.l.s4 1983009808
        %v667 = vunpack.c.0.s8 %v666
        %v668 = vperm.slane %v662, %v667
        %v670 = vunpack.c.l.s4 1983009808
        %v671 = vunpack.c.0.s8 %v670
        %v672 = vperm.slane %v664, %v671
        %v673 = vrot.slane %v636, 4
        %v674 = vsel %vm262, %v673, %v632
        %v675 = vrot.slane %v632, 4
        %v676 = vsel %vm262, %v636, %v675
        %v678 = vunpack.c.l.s4 1983009808
        %v679 = vunpack.c.0.s8 %v678
        %v680 = vperm.slane %v674, %v679
        %v682 = vunpack.c.l.s4 1983009808
        %v683 = vunpack.c.0.s8 %v682
        %v684 = vperm.slane %v676, %v683
        %v685 = vrot.slane %v656, 4
        %v686 = vsel %vm262, %v685, %v644
        %v687 = vrot.slane %v644, 4
        %v688 = vsel %vm262, %v656, %v687
        %v690 = vunpack.c.l.s4 1934713408
        %v691 = vunpack.c.0.s8 %v690
        %v692 = vperm.slane %v686, %v691
        %v694 = vunpack.c.l.s4 1934713408
        %v695 = vunpack.c.0.s8 %v694
        %v696 = vperm.slane %v688, %v695
        %v697 = vrot.slane %v660, 4
        %v698 = vsel %vm262, %v697, %v648
        %v699 = vrot.slane %v648, 4
        %v700 = vsel %vm262, %v660, %v699
        %v702 = vunpack.c.l.s4 1934713408
        %v703 = vunpack.c.0.s8 %v702
        %v704 = vperm.slane %v698, %v703
        %v706 = vunpack.c.l.s4 1934713408
        %v707 = vunpack.c.0.s8 %v706
        %v708 = vperm.slane %v700, %v707
        %v709 = vrot.slane %v680, 4
        %v710 = vsel %vm262, %v709, %v668
        %v711 = vrot.slane %v668, 4
        %v712 = vsel %vm262, %v680, %v711
        %v714 = vunpack.c.l.s4 1934713408
        %v715 = vunpack.c.0.s8 %v714
        %v716 = vperm.slane %v710, %v715
        %v718 = vunpack.c.l.s4 1934713408
        %v719 = vunpack.c.0.s8 %v718
        %v720 = vperm.slane %v712, %v719
        %v721 = vrot.slane %v684, 4
        %v722 = vsel %vm262, %v721, %v672
        %v723 = vrot.slane %v672, 4
        %v724 = vsel %vm262, %v684, %v723
        %v726 = vunpack.c.l.s4 1934713408
        %v727 = vunpack.c.0.s8 %v726
        %v728 = vperm.slane %v722, %v727
        %v730 = vunpack.c.l.s4 1934713408
        %v731 = vunpack.c.0.s8 %v730
        %v732 = vperm.slane %v724, %v731
        %v733 = vrot.slane %v716, 4
        %v734 = vsel %vm262, %v733, %v692
        %v735 = vrot.slane %v692, 4
        %v736 = vsel %vm262, %v716, %v735
        %v737 = vrot.slane %v720, 4
        %v738 = vsel %vm262, %v737, %v696
        %v739 = vrot.slane %v696, 4
        %v740 = vsel %vm262, %v720, %v739
        %v741 = vrot.slane %v728, 4
        %v742 = vsel %vm262, %v741, %v704
        %v743 = vrot.slane %v704, 4
        %v744 = vsel %vm262, %v728, %v743
        %v745 = vrot.slane %v732, 4
        %v746 = vsel %vm262, %v745, %v708
        %v747 = vrot.slane %v708, 4
        %v748 = vsel %vm262, %v732, %v747
        %749 = vrot.lane.b32.xlu0 %v236, 64
        %v750 = vpop.permute.xlu0 %749
        %751 = vrot.lane.b32.xlu0 %v488, 64
        %v752 = vpop.permute.xlu0 %751
        %753 = vrot.lane.b32.xlu0 %v490, 64
        %v754 = vpop.permute.xlu0 %753
        %755 = vrot.lane.b32.xlu0 %v492, 64
        %v756 = vpop.permute.xlu0 %755
        %757 = vrot.lane.b32.xlu0 %v494, 64
        %v758 = vpop.permute.xlu0 %757
        %759 = vrot.lane.b32.xlu0 %v496, 64
        %v760 = vpop.permute.xlu0 %759
        %761 = vrot.lane.b32.xlu0 %v498, 64
        %v762 = vpop.permute.xlu0 %761
        %763 = vrot.lane.b32.xlu0 %v500, 64
        %v764 = vpop.permute.xlu0 %763
        %v773 = vrot.slane %v754, 4
        %v774 = vsel %vm262, %v773, %v750
        %v775 = vrot.slane %v750, 4
        %v776 = vsel %vm262, %v754, %v775
        %v778 = vunpack.c.l.s4 1983009808
        %v779 = vunpack.c.0.s8 %v778
        %v780 = vperm.slane %v774, %v779
        %v782 = vunpack.c.l.s4 1983009808
        %v783 = vunpack.c.0.s8 %v782
        %v784 = vperm.slane %v776, %v783
        %v785 = vrot.slane %v756, 4
        %v786 = vsel %vm262, %v785, %v752
        %v787 = vrot.slane %v752, 4
        %v788 = vsel %vm262, %v756, %v787
        %v790 = vunpack.c.l.s4 1983009808
        %v791 = vunpack.c.0.s8 %v790
        %v792 = vperm.slane %v786, %v791
        %v794 = vunpack.c.l.s4 1983009808
        %v795 = vunpack.c.0.s8 %v794
        %v796 = vperm.slane %v788, %v795
        %v797 = vrot.slane %v762, 4
        %v798 = vsel %vm262, %v797, %v758
        %v799 = vrot.slane %v758, 4
        %v800 = vsel %vm262, %v762, %v799
        %v802 = vunpack.c.l.s4 1983009808
        %v803 = vunpack.c.0.s8 %v802
        %v804 = vperm.slane %v798, %v803
        %v806 = vunpack.c.l.s4 1983009808
        %v807 = vunpack.c.0.s8 %v806
        %v808 = vperm.slane %v800, %v807
        %v809 = vrot.slane %v764, 4
        %v810 = vsel %vm262, %v809, %v760
        %v811 = vrot.slane %v760, 4
        %v812 = vsel %vm262, %v764, %v811
        %v814 = vunpack.c.l.s4 1983009808
        %v815 = vunpack.c.0.s8 %v814
        %v816 = vperm.slane %v810, %v815
        %v818 = vunpack.c.l.s4 1983009808
        %v819 = vunpack.c.0.s8 %v818
        %v820 = vperm.slane %v812, %v819
        %v821 = vrot.slane %v792, 4
        %v822 = vsel %vm262, %v821, %v780
        %v823 = vrot.slane %v780, 4
        %v824 = vsel %vm262, %v792, %v823
        %v826 = vunpack.c.l.s4 1934713408
        %v827 = vunpack.c.0.s8 %v826
        %v828 = vperm.slane %v822, %v827
        %v830 = vunpack.c.l.s4 1934713408
        %v831 = vunpack.c.0.s8 %v830
        %v832 = vperm.slane %v824, %v831
        %v833 = vrot.slane %v796, 4
        %v834 = vsel %vm262, %v833, %v784
        %v835 = vrot.slane %v784, 4
        %v836 = vsel %vm262, %v796, %v835
        %v838 = vunpack.c.l.s4 1934713408
        %v839 = vunpack.c.0.s8 %v838
        %v840 = vperm.slane %v834, %v839
        %v842 = vunpack.c.l.s4 1934713408
        %v843 = vunpack.c.0.s8 %v842
        %v844 = vperm.slane %v836, %v843
        %v845 = vrot.slane %v816, 4
        %v846 = vsel %vm262, %v845, %v804
        %v847 = vrot.slane %v804, 4
        %v848 = vsel %vm262, %v816, %v847
        %v850 = vunpack.c.l.s4 1934713408
        %v851 = vunpack.c.0.s8 %v850
        %v852 = vperm.slane %v846, %v851
        %v854 = vunpack.c.l.s4 1934713408
        %v855 = vunpack.c.0.s8 %v854
        %v856 = vperm.slane %v848, %v855
        %v857 = vrot.slane %v820, 4
        %v858 = vsel %vm262, %v857, %v808
        %v859 = vrot.slane %v808, 4
        %v860 = vsel %vm262, %v820, %v859
        %v862 = vunpack.c.l.s4 1934713408
        %v863 = vunpack.c.0.s8 %v862
        %v864 = vperm.slane %v858, %v863
        %v866 = vunpack.c.l.s4 1934713408
        %v867 = vunpack.c.0.s8 %v866
        %v868 = vperm.slane %v860, %v867
        %v869 = vrot.slane %v852, 4
        %v870 = vsel %vm262, %v869, %v828
        %v871 = vrot.slane %v828, 4
        %v872 = vsel %vm262, %v852, %v871
        %v873 = vrot.slane %v856, 4
        %v874 = vsel %vm262, %v873, %v832
        %v875 = vrot.slane %v832, 4
        %v876 = vsel %vm262, %v856, %v875
        %v877 = vrot.slane %v864, 4
        %v878 = vsel %vm262, %v877, %v840
        %v879 = vrot.slane %v840, 4
        %v880 = vsel %vm262, %v864, %v879
        %v881 = vrot.slane %v868, 4
        %v882 = vsel %vm262, %v881, %v844
        %v883 = vrot.slane %v844, 4
        %v884 = vsel %vm262, %v868, %v883
        %v885 = vrot.slane %v874, 4
        %v886 = vsel %vm262, %v885, %v870
        %v887 = vrot.slane %v870, 4
        %v888 = vsel %vm262, %v874, %v887
        %v890 = vunpack.c.l.s4 1983009808
        %v891 = vunpack.c.0.s8 %v890
        %v892 = vperm.slane %v886, %v891
        %v894 = vunpack.c.l.s4 1983009808
        %v895 = vunpack.c.0.s8 %v894
        %v896 = vperm.slane %v888, %v895
        %v897 = vrot.slane %v876, 4
        %v898 = vsel %vm262, %v897, %v872
        %v899 = vrot.slane %v872, 4
        %v900 = vsel %vm262, %v876, %v899
        %v902 = vunpack.c.l.s4 1983009808
        %v903 = vunpack.c.0.s8 %v902
        %v904 = vperm.slane %v898, %v903
        %v906 = vunpack.c.l.s4 1983009808
        %v907 = vunpack.c.0.s8 %v906
        %v908 = vperm.slane %v900, %v907
        %v909 = vrot.slane %v882, 4
        %v910 = vsel %vm262, %v909, %v878
        %v911 = vrot.slane %v878, 4
        %v912 = vsel %vm262, %v882, %v911
        %v914 = vunpack.c.l.s4 1983009808
        %v915 = vunpack.c.0.s8 %v914
        %v916 = vperm.slane %v910, %v915
        %v918 = vunpack.c.l.s4 1983009808
        %v919 = vunpack.c.0.s8 %v918
        %v920 = vperm.slane %v912, %v919
        %v921 = vrot.slane %v884, 4
        %v922 = vsel %vm262, %v921, %v880
        %v923 = vrot.slane %v880, 4
        %v924 = vsel %vm262, %v884, %v923
        %v926 = vunpack.c.l.s4 1983009808
        %v927 = vunpack.c.0.s8 %v926
        %v928 = vperm.slane %v922, %v927
        %v930 = vunpack.c.l.s4 1983009808
        %v931 = vunpack.c.0.s8 %v930
        %v932 = vperm.slane %v924, %v931
        %v933 = vrot.slane %v904, 4
        %v934 = vsel %vm262, %v933, %v892
        %v935 = vrot.slane %v892, 4
        %v936 = vsel %vm262, %v904, %v935
        %v938 = vunpack.c.l.s4 1934713408
        %v939 = vunpack.c.0.s8 %v938
        %v940 = vperm.slane %v934, %v939
        %v942 = vunpack.c.l.s4 1934713408
        %v943 = vunpack.c.0.s8 %v942
        %v944 = vperm.slane %v936, %v943
        %v945 = vrot.slane %v908, 4
        %v946 = vsel %vm262, %v945, %v896
        %v947 = vrot.slane %v896, 4
        %v948 = vsel %vm262, %v908, %v947
        %v950 = vunpack.c.l.s4 1934713408
        %v951 = vunpack.c.0.s8 %v950
        %v952 = vperm.slane %v946, %v951
        %v954 = vunpack.c.l.s4 1934713408
        %v955 = vunpack.c.0.s8 %v954
        %v956 = vperm.slane %v948, %v955
        %v957 = vrot.slane %v928, 4
        %v958 = vsel %vm262, %v957, %v916
        %v959 = vrot.slane %v916, 4
        %v960 = vsel %vm262, %v928, %v959
        %v962 = vunpack.c.l.s4 1934713408
        %v963 = vunpack.c.0.s8 %v962
        %v964 = vperm.slane %v958, %v963
        %v966 = vunpack.c.l.s4 1934713408
        %v967 = vunpack.c.0.s8 %v966
        %v968 = vperm.slane %v960, %v967
        %v969 = vrot.slane %v932, 4
        %v970 = vsel %vm262, %v969, %v920
        %v971 = vrot.slane %v920, 4
        %v972 = vsel %vm262, %v932, %v971
        %v974 = vunpack.c.l.s4 1934713408
        %v975 = vunpack.c.0.s8 %v974
        %v976 = vperm.slane %v970, %v975
        %v978 = vunpack.c.l.s4 1934713408
        %v979 = vunpack.c.0.s8 %v978
        %v980 = vperm.slane %v972, %v979
        %v981 = vrot.slane %v964, 4
        %v982 = vsel %vm262, %v981, %v940
        %v983 = vrot.slane %v940, 4
        %v984 = vsel %vm262, %v964, %v983
        %v985 = vrot.slane %v968, 4
        %v986 = vsel %vm262, %v985, %v944
        %v987 = vrot.slane %v944, 4
        %v988 = vsel %vm262, %v968, %v987
        %v989 = vrot.slane %v976, 4
        %v990 = vsel %vm262, %v989, %v952
        %v991 = vrot.slane %v952, 4
        %v992 = vsel %vm262, %v976, %v991
        %v993 = vrot.slane %v980, 4
        %v994 = vsel %vm262, %v993, %v956
        %v995 = vrot.slane %v956, 4
        %v996 = vsel %vm262, %v980, %v995
        %vm997 = vcmask 31744
        %v999 = vsel %vm997, %v471, 0
        %v1002 = vsel %vm997, %v734, 0
        %1004 = vmatpush.xpose.msra.mxu0 0.0
        %1005 = vmatpush.xpose.msra.mxu0 0.0
        %1006 = vmatpush.xpose.msra.mxu0 0.0
        %1007 = vmatpush.xpose.msra.mxu0 0.0
        %1008 = vmatpush.xpose.msra.mxu0 0.0
        %1009 = vmatpush.xpose.msra.mxu0 0.0
        %1010 = vmatpush.xpose.msra.mxu0 0.0
        %1011 = vmatpush.xpose.msra.mxu0 0.0
        %1012 = vmatpush.xpose.msra.mxu0 0.0
        %1013 = vmatpush.xpose.msra.mxu0 0.0
        %1014 = vmatpush.xpose.msra.mxu0 0.0
        %1015 = vmatpush.xpose.msra.mxu0 0.0
        %1016 = vmatpush.xpose.msra.mxu0 0.0
        %1017 = vmatpush.xpose.msra.mxu0 0.0
        %1018 = vmatpush.xpose.msra.mxu0 0.0
        %1019 = vmatpush.xpose.msra.mxu0 %v1002
        %1020 = vmatmul.f32.gmra.mxu0 %v999
        %v1021 = vpop.f32.mrf.mxu0
        %v1022 = vadd.f32 0.0, %v1021
        %1023 = vdwg.mxu0
        %v1025 = vsel %vm997, %v473, 0
        %v1028 = vsel %vm997, %v736, 0
        %1030 = vmatpush.xpose.msra.mxu0 0.0
        %1031 = vmatpush.xpose.msra.mxu0 0.0
        %1032 = vmatpush.xpose.msra.mxu0 0.0
        %1033 = vmatpush.xpose.msra.mxu0 0.0
        %1034 = vmatpush.xpose.msra.mxu0 0.0
        %1035 = vmatpush.xpose.msra.mxu0 0.0
        %1036 = vmatpush.xpose.msra.mxu0 0.0
        %1037 = vmatpush.xpose.msra.mxu0 0.0
        %1038 = vmatpush.xpose.msra.mxu0 0.0
        %1039 = vmatpush.xpose.msra.mxu0 0.0
        %1040 = vmatpush.xpose.msra.mxu0 0.0
        %1041 = vmatpush.xpose.msra.mxu0 0.0
        %1042 = vmatpush.xpose.msra.mxu0 0.0
        %1043 = vmatpush.xpose.msra.mxu0 0.0
        %1044 = vmatpush.xpose.msra.mxu0 0.0
        %1045 = vmatpush.xpose.msra.mxu0 %v1028
        %1046 = vmatmul.f32.gmra.mxu0 %v1025
        %v1047 = vpop.f32.mrf.mxu0
        %v1048 = vadd.f32 0.0, %v1047
        %1049 = vdwg.mxu0
        %v1051 = vsel %vm997, %v475, 0
        %v1054 = vsel %vm997, %v738, 0
        %1056 = vmatpush.xpose.msra.mxu0 0.0
        %1057 = vmatpush.xpose.msra.mxu0 0.0
        %1058 = vmatpush.xpose.msra.mxu0 0.0
        %1059 = vmatpush.xpose.msra.mxu0 0.0
        %1060 = vmatpush.xpose.msra.mxu0 0.0
        %1061 = vmatpush.xpose.msra.mxu0 0.0
        %1062 = vmatpush.xpose.msra.mxu0 0.0
        %1063 = vmatpush.xpose.msra.mxu0 0.0
        %1064 = vmatpush.xpose.msra.mxu0 0.0
        %1065 = vmatpush.xpose.msra.mxu0 0.0
        %1066 = vmatpush.xpose.msra.mxu0 0.0
        %1067 = vmatpush.xpose.msra.mxu0 0.0
        %1068 = vmatpush.xpose.msra.mxu0 0.0
        %1069 = vmatpush.xpose.msra.mxu0 0.0
        %1070 = vmatpush.xpose.msra.mxu0 0.0
        %1071 = vmatpush.xpose.msra.mxu0 %v1054
        %1072 = vmatmul.f32.gmra.mxu0 %v1051
        %v1073 = vpop.f32.mrf.mxu0
        %v1074 = vadd.f32 0.0, %v1073
        %1075 = vdwg.mxu0
        %v1077 = vsel %vm997, %v477, 0
        %v1080 = vsel %vm997, %v740, 0
        %1082 = vmatpush.xpose.msra.mxu0 0.0
        %1083 = vmatpush.xpose.msra.mxu0 0.0
        %1084 = vmatpush.xpose.msra.mxu0 0.0
        %1085 = vmatpush.xpose.msra.mxu0 0.0
        %1086 = vmatpush.xpose.msra.mxu0 0.0
        %1087 = vmatpush.xpose.msra.mxu0 0.0
        %1088 = vmatpush.xpose.msra.mxu0 0.0
        %1089 = vmatpush.xpose.msra.mxu0 0.0
        %1090 = vmatpush.xpose.msra.mxu0 0.0
        %1091 = vmatpush.xpose.msra.mxu0 0.0
        %1092 = vmatpush.xpose.msra.mxu0 0.0
        %1093 = vmatpush.xpose.msra.mxu0 0.0
        %1094 = vmatpush.xpose.msra.mxu0 0.0
        %1095 = vmatpush.xpose.msra.mxu0 0.0
        %1096 = vmatpush.xpose.msra.mxu0 0.0
        %1097 = vmatpush.xpose.msra.mxu0 %v1080
        %1098 = vmatmul.f32.gmra.mxu0 %v1077
        %v1099 = vpop.f32.mrf.mxu0
        %v1100 = vadd.f32 0.0, %v1099
        %1101 = vdwg.mxu0
        %v1103 = vsel %vm997, %v479, 0
        %v1106 = vsel %vm997, %v742, 0
        %1108 = vmatpush.xpose.msra.mxu0 0.0
        %1109 = vmatpush.xpose.msra.mxu0 0.0
        %1110 = vmatpush.xpose.msra.mxu0 0.0
        %1111 = vmatpush.xpose.msra.mxu0 0.0
        %1112 = vmatpush.xpose.msra.mxu0 0.0
        %1113 = vmatpush.xpose.msra.mxu0 0.0
        %1114 = vmatpush.xpose.msra.mxu0 0.0
        %1115 = vmatpush.xpose.msra.mxu0 0.0
        %1116 = vmatpush.xpose.msra.mxu0 0.0
        %1117 = vmatpush.xpose.msra.mxu0 0.0
        %1118 = vmatpush.xpose.msra.mxu0 0.0
        %1119 = vmatpush.xpose.msra.mxu0 0.0
        %1120 = vmatpush.xpose.msra.mxu0 0.0
        %1121 = vmatpush.xpose.msra.mxu0 0.0
        %1122 = vmatpush.xpose.msra.mxu0 0.0
        %1123 = vmatpush.xpose.msra.mxu0 %v1106
        %1124 = vmatmul.f32.gmra.mxu0 %v1103
        %v1125 = vpop.f32.mrf.mxu0
        %v1126 = vadd.f32 0.0, %v1125
        %1127 = vdwg.mxu0
        %v1129 = vsel %vm997, %v481, 0
        %v1132 = vsel %vm997, %v744, 0
        %1134 = vmatpush.xpose.msra.mxu0 0.0
        %1135 = vmatpush.xpose.msra.mxu0 0.0
        %1136 = vmatpush.xpose.msra.mxu0 0.0
        %1137 = vmatpush.xpose.msra.mxu0 0.0
        %1138 = vmatpush.xpose.msra.mxu0 0.0
        %1139 = vmatpush.xpose.msra.mxu0 0.0
        %1140 = vmatpush.xpose.msra.mxu0 0.0
        %1141 = vmatpush.xpose.msra.mxu0 0.0
        %1142 = vmatpush.xpose.msra.mxu0 0.0
        %1143 = vmatpush.xpose.msra.mxu0 0.0
        %1144 = vmatpush.xpose.msra.mxu0 0.0
        %1145 = vmatpush.xpose.msra.mxu0 0.0
        %1146 = vmatpush.xpose.msra.mxu0 0.0
        %1147 = vmatpush.xpose.msra.mxu0 0.0
        %1148 = vmatpush.xpose.msra.mxu0 0.0
        %1149 = vmatpush.xpose.msra.mxu0 %v1132
        %1150 = vmatmul.f32.gmra.mxu0 %v1129
        %v1151 = vpop.f32.mrf.mxu0
        %v1152 = vadd.f32 0.0, %v1151
        %1153 = vdwg.mxu0
        %v1155 = vsel %vm997, %v483, 0
        %v1158 = vsel %vm997, %v746, 0
        %1160 = vmatpush.xpose.msra.mxu0 0.0
        %1161 = vmatpush.xpose.msra.mxu0 0.0
        %1162 = vmatpush.xpose.msra.mxu0 0.0
        %1163 = vmatpush.xpose.msra.mxu0 0.0
        %1164 = vmatpush.xpose.msra.mxu0 0.0
        %1165 = vmatpush.xpose.msra.mxu0 0.0
        %1166 = vmatpush.xpose.msra.mxu0 0.0
        %1167 = vmatpush.xpose.msra.mxu0 0.0
        %1168 = vmatpush.xpose.msra.mxu0 0.0
        %1169 = vmatpush.xpose.msra.mxu0 0.0
        %1170 = vmatpush.xpose.msra.mxu0 0.0
        %1171 = vmatpush.xpose.msra.mxu0 0.0
        %1172 = vmatpush.xpose.msra.mxu0 0.0
        %1173 = vmatpush.xpose.msra.mxu0 0.0
        %1174 = vmatpush.xpose.msra.mxu0 0.0
        %1175 = vmatpush.xpose.msra.mxu0 %v1158
        %1176 = vmatmul.f32.gmra.mxu0 %v1155
        %v1177 = vpop.f32.mrf.mxu0
        %v1178 = vadd.f32 0.0, %v1177
        %1179 = vdwg.mxu0
        %v1181 = vsel %vm997, %v485, 0
        %v1184 = vsel %vm997, %v748, 0
        %1186 = vmatpush.xpose.msra.mxu0 0.0
        %1187 = vmatpush.xpose.msra.mxu0 0.0
        %1188 = vmatpush.xpose.msra.mxu0 0.0
        %1189 = vmatpush.xpose.msra.mxu0 0.0
        %1190 = vmatpush.xpose.msra.mxu0 0.0
        %1191 = vmatpush.xpose.msra.mxu0 0.0
        %1192 = vmatpush.xpose.msra.mxu0 0.0
        %1193 = vmatpush.xpose.msra.mxu0 0.0
        %1194 = vmatpush.xpose.msra.mxu0 0.0
        %1195 = vmatpush.xpose.msra.mxu0 0.0
        %1196 = vmatpush.xpose.msra.mxu0 0.0
        %1197 = vmatpush.xpose.msra.mxu0 0.0
        %1198 = vmatpush.xpose.msra.mxu0 0.0
        %1199 = vmatpush.xpose.msra.mxu0 0.0
        %1200 = vmatpush.xpose.msra.mxu0 0.0
        %1201 = vmatpush.xpose.msra.mxu0 %v1184
        %1202 = vmatmul.f32.gmra.mxu0 %v1181
        %v1203 = vpop.f32.mrf.mxu0
        %v1204 = vadd.f32 0.0, %v1203
        %1205 = vdwg.mxu0
        %vm1206 = vcmask 64512
        %v1207 = vsel %vm1206, %v1022, -inf
        %1208 = vmax.xlane.f32.xlu0 %v1207
        %v1209 = vpop.xlane.xlu0 %1208
        %v1210 = vsel %vm1206, %v1048, -inf
        %1211 = vmax.xlane.f32.xlu0 %v1210
        %v1212 = vpop.xlane.xlu0 %1211
        %v1213 = vsel %vm1206, %v1074, -inf
        %1214 = vmax.xlane.f32.xlu0 %v1213
        %v1215 = vpop.xlane.xlu0 %1214
        %v1216 = vsel %vm1206, %v1100, -inf
        %1217 = vmax.xlane.f32.xlu0 %v1216
        %v1218 = vpop.xlane.xlu0 %1217
        %v1219 = vsel %vm1206, %v1126, -inf
        %1220 = vmax.xlane.f32.xlu0 %v1219
        %v1221 = vpop.xlane.xlu0 %1220
        %v1222 = vsel %vm1206, %v1152, -inf
        %1223 = vmax.xlane.f32.xlu0 %v1222
        %v1224 = vpop.xlane.xlu0 %1223
        %v1225 = vsel %vm1206, %v1178, -inf
        %1226 = vmax.xlane.f32.xlu0 %v1225
        %v1227 = vpop.xlane.xlu0 %1226
        %v1228 = vsel %vm1206, %v1204, -inf
        %1229 = vmax.xlane.f32.xlu0 %v1228
        %v1230 = vpop.xlane.xlu0 %1229
        %v1231 = vsub.f32 %v1022, %v1209
        %v1232 = vsub.f32 %v1048, %v1212
        %v1233 = vsub.f32 %v1074, %v1215
        %v1234 = vsub.f32 %v1100, %v1218
        %v1235 = vsub.f32 %v1126, %v1221
        %v1236 = vsub.f32 %v1152, %v1224
        %v1237 = vsub.f32 %v1178, %v1227
        %v1238 = vsub.f32 %v1204, %v1230
        %v1239 = vmul.f32 %v1231, 1.442695
        %v1240 = vpow.pop %v1239
        %v1241 = vmul.f32 %v1232, 1.442695
        %v1242 = vpow.pop %v1241
        %v1243 = vmul.f32 %v1233, 1.442695
        %v1244 = vpow.pop %v1243
        %v1245 = vmul.f32 %v1234, 1.442695
        %v1246 = vpow.pop %v1245
        %v1247 = vmul.f32 %v1235, 1.442695
        %v1248 = vpow.pop %v1247
        %v1249 = vmul.f32 %v1236, 1.442695
        %v1250 = vpow.pop %v1249
        %v1251 = vmul.f32 %v1237, 1.442695
        %v1252 = vpow.pop %v1251
        %v1253 = vmul.f32 %v1238, 1.442695
        %v1254 = vpow.pop %v1253
        %v1255 = vsel %vm1206, %v1240, 0.0
        %1256 = vadd.xlane.f32.xlu0 %v1255
        %v1257 = vpop.xlane.xlu0 %1256
        %v1258 = vsel %vm1206, %v1242, 0.0
        %1259 = vadd.xlane.f32.xlu0 %v1258
        %v1260 = vpop.xlane.xlu0 %1259
        %v1261 = vsel %vm1206, %v1244, 0.0
        %1262 = vadd.xlane.f32.xlu0 %v1261
        %v1263 = vpop.xlane.xlu0 %1262
        %v1264 = vsel %vm1206, %v1246, 0.0
        %1265 = vadd.xlane.f32.xlu0 %v1264
        %v1266 = vpop.xlane.xlu0 %1265
        %v1267 = vsel %vm1206, %v1248, 0.0
        %1268 = vadd.xlane.f32.xlu0 %v1267
        %v1269 = vpop.xlane.xlu0 %1268
        %v1270 = vsel %vm1206, %v1250, 0.0
        %1271 = vadd.xlane.f32.xlu0 %v1270
        %v1272 = vpop.xlane.xlu0 %1271
        %v1273 = vsel %vm1206, %v1252, 0.0
        %1274 = vadd.xlane.f32.xlu0 %v1273
        %v1275 = vpop.xlane.xlu0 %1274
        %v1276 = vsel %vm1206, %v1254, 0.0
        %1277 = vadd.xlane.f32.xlu0 %v1276
        %v1278 = vpop.xlane.xlu0 %1277
        %v1279 = vrcp.pop %v1257
        %v1280 = vrcp.pop %v1260
        %v1281 = vrcp.pop %v1263
        %v1282 = vrcp.pop %v1266
        %v1283 = vrcp.pop %v1269
        %v1284 = vrcp.pop %v1272
        %v1285 = vrcp.pop %v1275
        %v1286 = vrcp.pop %v1278
        %v1287 = vmul.f32 %v1240, %v1279
        %v1288 = vmul.f32 %v1242, %v1280
        %v1289 = vmul.f32 %v1244, %v1281
        %v1290 = vmul.f32 %v1246, %v1282
        %v1291 = vmul.f32 %v1248, %v1283
        %v1292 = vmul.f32 %v1250, %v1284
        %v1293 = vmul.f32 %v1252, %v1285
        %v1294 = vmul.f32 %v1254, %v1286
        %v1296 = vsel %vm1206, %v1287, 0
        %1298 = vmatpush.msra.mxu0 0.0
        %1299 = vmatpush.msra.mxu0 0.0
        %1300 = vmatpush.msra.mxu0 0.0
        %1301 = vmatpush.msra.mxu0 0.0
        %1302 = vmatpush.msra.mxu0 0.0
        %1303 = vmatpush.msra.mxu0 0.0
        %1304 = vmatpush.msra.mxu0 0.0
        %1305 = vmatpush.msra.mxu0 0.0
        %1306 = vmatpush.msra.mxu0 0.0
        %1307 = vmatpush.msra.mxu0 0.0
        %1308 = vmatpush.msra.mxu0 0.0
        %1309 = vmatpush.msra.mxu0 0.0
        %1310 = vmatpush.msra.mxu0 0.0
        %1311 = vmatpush.msra.mxu0 0.0
        %1312 = vmatpush.msra.mxu0 0.0
        %1313 = vmatpush.msra.mxu0 %v982
        %1314 = vmatmul.f32.gmra.mxu0 %v1296
        %v1315 = vpop.f32.mrf.mxu0
        %v1316 = vadd.f32 0.0, %v1315
        %1317 = vdwg.mxu0
        %v1319 = vsel %vm1206, %v1288, 0
        %1321 = vmatpush.msra.mxu0 0.0
        %1322 = vmatpush.msra.mxu0 0.0
        %1323 = vmatpush.msra.mxu0 0.0
        %1324 = vmatpush.msra.mxu0 0.0
        %1325 = vmatpush.msra.mxu0 0.0
        %1326 = vmatpush.msra.mxu0 0.0
        %1327 = vmatpush.msra.mxu0 0.0
        %1328 = vmatpush.msra.mxu0 0.0
        %1329 = vmatpush.msra.mxu0 0.0
        %1330 = vmatpush.msra.mxu0 0.0
        %1331 = vmatpush.msra.mxu0 0.0
        %1332 = vmatpush.msra.mxu0 0.0
        %1333 = vmatpush.msra.mxu0 0.0
        %1334 = vmatpush.msra.mxu0 0.0
        %1335 = vmatpush.msra.mxu0 0.0
        %1336 = vmatpush.msra.mxu0 %v984
        %1337 = vmatmul.f32.gmra.mxu0 %v1319
        %v1338 = vpop.f32.mrf.mxu0
        %v1339 = vadd.f32 0.0, %v1338
        %1340 = vdwg.mxu0
        %v1342 = vsel %vm1206, %v1289, 0
        %1344 = vmatpush.msra.mxu0 0.0
        %1345 = vmatpush.msra.mxu0 0.0
        %1346 = vmatpush.msra.mxu0 0.0
        %1347 = vmatpush.msra.mxu0 0.0
        %1348 = vmatpush.msra.mxu0 0.0
        %1349 = vmatpush.msra.mxu0 0.0
        %1350 = vmatpush.msra.mxu0 0.0
        %1351 = vmatpush.msra.mxu0 0.0
        %1352 = vmatpush.msra.mxu0 0.0
        %1353 = vmatpush.msra.mxu0 0.0
        %1354 = vmatpush.msra.mxu0 0.0
        %1355 = vmatpush.msra.mxu0 0.0
        %1356 = vmatpush.msra.mxu0 0.0
        %1357 = vmatpush.msra.mxu0 0.0
        %1358 = vmatpush.msra.mxu0 0.0
        %1359 = vmatpush.msra.mxu0 %v986
        %1360 = vmatmul.f32.gmra.mxu0 %v1342
        %v1361 = vpop.f32.mrf.mxu0
        %v1362 = vadd.f32 0.0, %v1361
        %1363 = vdwg.mxu0
        %v1365 = vsel %vm1206, %v1290, 0
        %1367 = vmatpush.msra.mxu0 0.0
        %1368 = vmatpush.msra.mxu0 0.0
        %1369 = vmatpush.msra.mxu0 0.0
        %1370 = vmatpush.msra.mxu0 0.0
        %1371 = vmatpush.msra.mxu0 0.0
        %1372 = vmatpush.msra.mxu0 0.0
        %1373 = vmatpush.msra.mxu0 0.0
        %1374 = vmatpush.msra.mxu0 0.0
        %1375 = vmatpush.msra.mxu0 0.0
        %1376 = vmatpush.msra.mxu0 0.0
        %1377 = vmatpush.msra.mxu0 0.0
        %1378 = vmatpush.msra.mxu0 0.0
        %1379 = vmatpush.msra.mxu0 0.0
        %1380 = vmatpush.msra.mxu0 0.0
        %1381 = vmatpush.msra.mxu0 0.0
        %1382 = vmatpush.msra.mxu0 %v988
        %1383 = vmatmul.f32.gmra.mxu0 %v1365
        %v1384 = vpop.f32.mrf.mxu0
        %v1385 = vadd.f32 0.0, %v1384
        %1386 = vdwg.mxu0
        %v1388 = vsel %vm1206, %v1291, 0
        %1390 = vmatpush.msra.mxu0 0.0
        %1391 = vmatpush.msra.mxu0 0.0
        %1392 = vmatpush.msra.mxu0 0.0
        %1393 = vmatpush.msra.mxu0 0.0
        %1394 = vmatpush.msra.mxu0 0.0
        %1395 = vmatpush.msra.mxu0 0.0
        %1396 = vmatpush.msra.mxu0 0.0
        %1397 = vmatpush.msra.mxu0 0.0
        %1398 = vmatpush.msra.mxu0 0.0
        %1399 = vmatpush.msra.mxu0 0.0
        %1400 = vmatpush.msra.mxu0 0.0
        %1401 = vmatpush.msra.mxu0 0.0
        %1402 = vmatpush.msra.mxu0 0.0
        %1403 = vmatpush.msra.mxu0 0.0
        %1404 = vmatpush.msra.mxu0 0.0
        %1405 = vmatpush.msra.mxu0 %v990
        %1406 = vmatmul.f32.gmra.mxu0 %v1388
        %v1407 = vpop.f32.mrf.mxu0
        %v1408 = vadd.f32 0.0, %v1407
        %1409 = vdwg.mxu0
        %v1411 = vsel %vm1206, %v1292, 0
        %1413 = vmatpush.msra.mxu0 0.0
        %1414 = vmatpush.msra.mxu0 0.0
        %1415 = vmatpush.msra.mxu0 0.0
        %1416 = vmatpush.msra.mxu0 0.0
        %1417 = vmatpush.msra.mxu0 0.0
        %1418 = vmatpush.msra.mxu0 0.0
        %1419 = vmatpush.msra.mxu0 0.0
        %1420 = vmatpush.msra.mxu0 0.0
        %1421 = vmatpush.msra.mxu0 0.0
        %1422 = vmatpush.msra.mxu0 0.0
        %1423 = vmatpush.msra.mxu0 0.0
        %1424 = vmatpush.msra.mxu0 0.0
        %1425 = vmatpush.msra.mxu0 0.0
        %1426 = vmatpush.msra.mxu0 0.0
        %1427 = vmatpush.msra.mxu0 0.0
        %1428 = vmatpush.msra.mxu0 %v992
        %1429 = vmatmul.f32.gmra.mxu0 %v1411
        %v1430 = vpop.f32.mrf.mxu0
        %v1431 = vadd.f32 0.0, %v1430
        %1432 = vdwg.mxu0
        %v1434 = vsel %vm1206, %v1293, 0
        %1436 = vmatpush.msra.mxu0 0.0
        %1437 = vmatpush.msra.mxu0 0.0
        %1438 = vmatpush.msra.mxu0 0.0
        %1439 = vmatpush.msra.mxu0 0.0
        %1440 = vmatpush.msra.mxu0 0.0
        %1441 = vmatpush.msra.mxu0 0.0
        %1442 = vmatpush.msra.mxu0 0.0
        %1443 = vmatpush.msra.mxu0 0.0
        %1444 = vmatpush.msra.mxu0 0.0
        %1445 = vmatpush.msra.mxu0 0.0
        %1446 = vmatpush.msra.mxu0 0.0
        %1447 = vmatpush.msra.mxu0 0.0
        %1448 = vmatpush.msra.mxu0 0.0
        %1449 = vmatpush.msra.mxu0 0.0
        %1450 = vmatpush.msra.mxu0 0.0
        %1451 = vmatpush.msra.mxu0 %v994
        %1452 = vmatmul.f32.gmra.mxu0 %v1434
        %v1453 = vpop.f32.mrf.mxu0
        %v1454 = vadd.f32 0.0, %v1453
        %1455 = vdwg.mxu0
        %v1457 = vsel %vm1206, %v1294, 0
        %1459 = vmatpush.msra.mxu0 0.0
        %1460 = vmatpush.msra.mxu0 0.0
        %1461 = vmatpush.msra.mxu0 0.0
        %1462 = vmatpush.msra.mxu0 0.0
        %1463 = vmatpush.msra.mxu0 0.0
        %1464 = vmatpush.msra.mxu0 0.0
        %1465 = vmatpush.msra.mxu0 0.0
        %1466 = vmatpush.msra.mxu0 0.0
        %1467 = vmatpush.msra.mxu0 0.0
        %1468 = vmatpush.msra.mxu0 0.0
        %1469 = vmatpush.msra.mxu0 0.0
        %1470 = vmatpush.msra.mxu0 0.0
        %1471 = vmatpush.msra.mxu0 0.0
        %1472 = vmatpush.msra.mxu0 0.0
        %1473 = vmatpush.msra.mxu0 0.0
        %1474 = vmatpush.msra.mxu0 %v996
        %1475 = vmatmul.f32.gmra.mxu0 %v1457
        %v1476 = vpop.f32.mrf.mxu0
        %v1477 = vadd.f32 0.0, %v1476
        %1478 = vdwg.mxu0
        %v1479 = vrot.slane %v1362, 4
        %v1480 = vsel %vm262, %v1479, %v1316
        %v1481 = vrot.slane %v1316, 4
        %v1482 = vsel %vm262, %v1362, %v1481
        %v1484 = vunpack.c.l.s4 1983009808
        %v1485 = vunpack.c.0.s8 %v1484
        %v1486 = vperm.slane %v1480, %v1485
        %v1488 = vunpack.c.l.s4 1983009808
        %v1489 = vunpack.c.0.s8 %v1488
        %v1490 = vperm.slane %v1482, %v1489
        %v1491 = vrot.slane %v1385, 4
        %v1492 = vsel %vm262, %v1491, %v1339
        %v1493 = vrot.slane %v1339, 4
        %v1494 = vsel %vm262, %v1385, %v1493
        %v1496 = vunpack.c.l.s4 1983009808
        %v1497 = vunpack.c.0.s8 %v1496
        %v1498 = vperm.slane %v1492, %v1497
        %v1500 = vunpack.c.l.s4 1983009808
        %v1501 = vunpack.c.0.s8 %v1500
        %v1502 = vperm.slane %v1494, %v1501
        %v1503 = vrot.slane %v1454, 4
        %v1504 = vsel %vm262, %v1503, %v1408
        %v1505 = vrot.slane %v1408, 4
        %v1506 = vsel %vm262, %v1454, %v1505
        %v1508 = vunpack.c.l.s4 1983009808
        %v1509 = vunpack.c.0.s8 %v1508
        %v1510 = vperm.slane %v1504, %v1509
        %v1512 = vunpack.c.l.s4 1983009808
        %v1513 = vunpack.c.0.s8 %v1512
        %v1514 = vperm.slane %v1506, %v1513
        %v1515 = vrot.slane %v1477, 4
        %v1516 = vsel %vm262, %v1515, %v1431
        %v1517 = vrot.slane %v1431, 4
        %v1518 = vsel %vm262, %v1477, %v1517
        %v1520 = vunpack.c.l.s4 1983009808
        %v1521 = vunpack.c.0.s8 %v1520
        %v1522 = vperm.slane %v1516, %v1521
        %v1524 = vunpack.c.l.s4 1983009808
        %v1525 = vunpack.c.0.s8 %v1524
        %v1526 = vperm.slane %v1518, %v1525
        %v1527 = vrot.slane %v1498, 4
        %v1528 = vsel %vm262, %v1527, %v1486
        %v1529 = vrot.slane %v1486, 4
        %v1530 = vsel %vm262, %v1498, %v1529
        %v1532 = vunpack.c.l.s4 1934713408
        %v1533 = vunpack.c.0.s8 %v1532
        %v1534 = vperm.slane %v1528, %v1533
        %v1536 = vunpack.c.l.s4 1934713408
        %v1537 = vunpack.c.0.s8 %v1536
        %v1538 = vperm.slane %v1530, %v1537
        %v1539 = vrot.slane %v1502, 4
        %v1540 = vsel %vm262, %v1539, %v1490
        %v1541 = vrot.slane %v1490, 4
        %v1542 = vsel %vm262, %v1502, %v1541
        %v1544 = vunpack.c.l.s4 1934713408
        %v1545 = vunpack.c.0.s8 %v1544
        %v1546 = vperm.slane %v1540, %v1545
        %v1548 = vunpack.c.l.s4 1934713408
        %v1549 = vunpack.c.0.s8 %v1548
        %v1550 = vperm.slane %v1542, %v1549
        %v1551 = vrot.slane %v1522, 4
        %v1552 = vsel %vm262, %v1551, %v1510
        %v1553 = vrot.slane %v1510, 4
        %v1554 = vsel %vm262, %v1522, %v1553
        %v1556 = vunpack.c.l.s4 1934713408
        %v1557 = vunpack.c.0.s8 %v1556
        %v1558 = vperm.slane %v1552, %v1557
        %v1560 = vunpack.c.l.s4 1934713408
        %v1561 = vunpack.c.0.s8 %v1560
        %v1562 = vperm.slane %v1554, %v1561
        %v1563 = vrot.slane %v1526, 4
        %v1564 = vsel %vm262, %v1563, %v1514
        %v1565 = vrot.slane %v1514, 4
        %v1566 = vsel %vm262, %v1526, %v1565
        %v1568 = vunpack.c.l.s4 1934713408
        %v1569 = vunpack.c.0.s8 %v1568
        %v1570 = vperm.slane %v1564, %v1569
        %v1572 = vunpack.c.l.s4 1934713408
        %v1573 = vunpack.c.0.s8 %v1572
        %v1574 = vperm.slane %v1566, %v1573
        %v1575 = vrot.slane %v1558, 4
        %v1576 = vsel %vm262, %v1575, %v1534
        %v1577 = vrot.slane %v1534, 4
        %v1578 = vsel %vm262, %v1558, %v1577
        %v1579 = vrot.slane %v1562, 4
        %v1580 = vsel %vm262, %v1579, %v1538
        %v1581 = vrot.slane %v1538, 4
        %v1582 = vsel %vm262, %v1562, %v1581
        %v1583 = vrot.slane %v1570, 4
        %v1584 = vsel %vm262, %v1583, %v1546
        %v1585 = vrot.slane %v1546, 4
        %v1586 = vsel %vm262, %v1570, %v1585
        %v1587 = vrot.slane %v1574, 4
        %v1588 = vsel %vm262, %v1587, %v1550
        %v1589 = vrot.slane %v1550, 4
        %v1590 = vsel %vm262, %v1574, %v1589
        %v1591 = vrot.slane %v1580, 4
        %v1592 = vsel %vm262, %v1591, %v1576
        %v1593 = vrot.slane %v1576, 4
        %v1594 = vsel %vm262, %v1580, %v1593
        %v1596 = vunpack.c.l.s4 1983009808
        %v1597 = vunpack.c.0.s8 %v1596
        %v1598 = vperm.slane %v1592, %v1597
        %v1600 = vunpack.c.l.s4 1983009808
        %v1601 = vunpack.c.0.s8 %v1600
        %v1602 = vperm.slane %v1594, %v1601
        %v1603 = vrot.slane %v1582, 4
        %v1604 = vsel %vm262, %v1603, %v1578
        %v1605 = vrot.slane %v1578, 4
        %v1606 = vsel %vm262, %v1582, %v1605
        %v1608 = vunpack.c.l.s4 1983009808
        %v1609 = vunpack.c.0.s8 %v1608
        %v1610 = vperm.slane %v1604, %v1609
        %v1612 = vunpack.c.l.s4 1983009808
        %v1613 = vunpack.c.0.s8 %v1612
        %v1614 = vperm.slane %v1606, %v1613
        %v1615 = vrot.slane %v1588, 4
        %v1616 = vsel %vm262, %v1615, %v1584
        %v1617 = vrot.slane %v1584, 4
        %v1618 = vsel %vm262, %v1588, %v1617
        %v1620 = vunpack.c.l.s4 1983009808
        %v1621 = vunpack.c.0.s8 %v1620
        %v1622 = vperm.slane %v1616, %v1621
        %v1624 = vunpack.c.l.s4 1983009808
        %v1625 = vunpack.c.0.s8 %v1624
        %v1626 = vperm.slane %v1618, %v1625
        %v1627 = vrot.slane %v1590, 4
        %v1628 = vsel %vm262, %v1627, %v1586
        %v1629 = vrot.slane %v1586, 4
        %v1630 = vsel %vm262, %v1590, %v1629
        %v1632 = vunpack.c.l.s4 1983009808
        %v1633 = vunpack.c.0.s8 %v1632
        %v1634 = vperm.slane %v1628, %v1633
        %v1636 = vunpack.c.l.s4 1983009808
        %v1637 = vunpack.c.0.s8 %v1636
        %v1638 = vperm.slane %v1630, %v1637
        %v1639 = vrot.slane %v1610, 4
        %v1640 = vsel %vm262, %v1639, %v1598
        %v1641 = vrot.slane %v1598, 4
        %v1642 = vsel %vm262, %v1610, %v1641
        %v1644 = vunpack.c.l.s4 1934713408
        %v1645 = vunpack.c.0.s8 %v1644
        %v1646 = vperm.slane %v1640, %v1645
        %v1648 = vunpack.c.l.s4 1934713408
        %v1649 = vunpack.c.0.s8 %v1648
        %v1650 = vperm.slane %v1642, %v1649
        %v1651 = vrot.slane %v1614, 4
        %v1652 = vsel %vm262, %v1651, %v1602
        %v1653 = vrot.slane %v1602, 4
        %v1654 = vsel %vm262, %v1614, %v1653
        %v1656 = vunpack.c.l.s4 1934713408
        %v1657 = vunpack.c.0.s8 %v1656
        %v1658 = vperm.slane %v1652, %v1657
        %v1660 = vunpack.c.l.s4 1934713408
        %v1661 = vunpack.c.0.s8 %v1660
        %v1662 = vperm.slane %v1654, %v1661
        %v1663 = vrot.slane %v1634, 4
        %v1664 = vsel %vm262, %v1663, %v1622
        %v1665 = vrot.slane %v1622, 4
        %v1666 = vsel %vm262, %v1634, %v1665
        %v1668 = vunpack.c.l.s4 1934713408
        %v1669 = vunpack.c.0.s8 %v1668
        %v1670 = vperm.slane %v1664, %v1669
        %v1672 = vunpack.c.l.s4 1934713408
        %v1673 = vunpack.c.0.s8 %v1672
        %v1674 = vperm.slane %v1666, %v1673
        %v1675 = vrot.slane %v1638, 4
        %v1676 = vsel %vm262, %v1675, %v1626
        %v1677 = vrot.slane %v1626, 4
        %v1678 = vsel %vm262, %v1638, %v1677
        %v1680 = vunpack.c.l.s4 1934713408
        %v1681 = vunpack.c.0.s8 %v1680
        %v1682 = vperm.slane %v1676, %v1681
        %v1684 = vunpack.c.l.s4 1934713408
        %v1685 = vunpack.c.0.s8 %v1684
        %v1686 = vperm.slane %v1678, %v1685
        %v1687 = vrot.slane %v1670, 4
        %v1688 = vsel %vm262, %v1687, %v1646
        %v1689 = vrot.slane %v1646, 4
        %v1690 = vsel %vm262, %v1670, %v1689
        %v1691 = vrot.slane %v1674, 4
        %v1692 = vsel %vm262, %v1691, %v1650
        %v1693 = vrot.slane %v1650, 4
        %v1694 = vsel %vm262, %v1674, %v1693
        %v1695 = vrot.slane %v1682, 4
        %v1696 = vsel %vm262, %v1695, %v1658
        %v1697 = vrot.slane %v1658, 4
        %v1698 = vsel %vm262, %v1682, %v1697
        %v1699 = vrot.slane %v1686, 4
        %v1700 = vsel %vm262, %v1699, %v1662
        %v1701 = vrot.slane %v1662, 4
        %v1702 = vsel %vm262, %v1686, %v1701
        %1704 = vrot.lane.b32.xlu0 %v1690, 4
        %v1705 = vpop.permute.xlu0 %1704
        %1708 = vrot.lane.b32.xlu0 %v1692, 8
        %v1709 = vpop.permute.xlu0 %1708
        %1712 = vrot.lane.b32.xlu0 %v1694, 12
        %v1713 = vpop.permute.xlu0 %1712
        %1716 = vrot.lane.b32.xlu0 %v1696, 16
        %v1717 = vpop.permute.xlu0 %1716
        %1720 = vrot.lane.b32.xlu0 %v1698, 20
        %v1721 = vpop.permute.xlu0 %1720
        %1724 = vrot.lane.b32.xlu0 %v1700, 24
        %v1725 = vpop.permute.xlu0 %1724
        %1728 = vrot.lane.b32.xlu0 %v1702, 28
        %v1729 = vpop.permute.xlu0 %1728
        %v1731 = vsel %vm997, %v1688, %v1705
        %v1732 = vsel %vm1206, %v1731, %v1709
        %vm1733 = vcmask 97280
        %v1734 = vsel %vm1733, %v1732, %v1713
        %vm1735 = vcmask 130048
        %v1736 = vsel %vm1735, %v1734, %v1717
        %vm1737 = vcmask 162816
        %v1738 = vsel %vm1737, %v1736, %v1721
        %vm1739 = vcmask 195584
        %v1740 = vsel %vm1739, %v1738, %v1725
        %vm1741 = vcmask 228352
        %v1742 = vsel %vm1741, %v1740, %v1729
        %1743 = vst.msk [vmem:[%s204] sm:$0xff] %vm214, %v1742
        %s1744 = sand.u32 %s97, 1
        %s1745 = scalar_lea.sflag [#allocation4], %s1744
        %s1746 = sand.u32 %s97, 1
        %s1747 = smul.addr %s1746, 8
        %s1748 = scalar_lea.vmem [#allocation7], %s1747
        // Predicated region
        $region41: #{tpu_custom_call.1} parent=31 // pred_check
          %p1749 = pneg %p107
        $region42: #{tpu_custom_call.1} parent=31 // pred_check_branch
          %1751 = sbr.rel (%p1749) target = $region44
        $region43: #{tpu_custom_call.1} parent=31 // pred_region
          %1753 = vsyncadd %s1745, 0
          %s1754 = smul.addr %s21, 8
          %s1755 = scalar_lea.hbm %s3, %s1754
          %s1757 = sshll.u32 %s1748, 4
          %s1758 = int_to_ptr.vmem [resolvable:$true] %s1757
          %s1759 = sshll.u32 %s1755, 4
          %s1760 = int_to_ptr.hbm [resolvable:$true] %s1759
          %1762 = dma.vmem_to_hbm [thread:$0]  %s1758, 128, %s1760, %s1745
        $region44: #{tpu_custom_call.1} parent=31 // pred_fallthru
          _
      $region32: #{tpu_custom_call.1} parent=5 // pred_fallthru
        _
      %p1763 = scmp.le.s32.totalorder 2, %s16
      // Predicated region
      $region45: #{tpu_custom_call.1} parent=5 // pred_check
        %p1764 = pneg %p1763
      $region46: #{tpu_custom_call.1} parent=5 // pred_check_branch
        %1766 = sbr.rel (%p1764) target = $region48
      $region47: #{tpu_custom_call.1} parent=5 // pred_region
        %s1767 = ssub.s32 %s16, 2
        // Predicated region
        $region49: #{tpu_custom_call.1} parent=47 // pred_check
          %p1768 = pneg %p113
        $region50: #{tpu_custom_call.1} parent=47 // pred_check_branch
          %1770 = sbr.rel (%p1768) target = $region52
        $region51: #{tpu_custom_call.1} parent=47 // pred_region
          %s1771 = sand.u32 %s98, 1
          %s1772 = scalar_lea.sflag [#allocation4], %s1771
          %s1773 = sand.u32 %s98, 1
          %s1774 = smul.addr %s1773, 8
          %s1775 = scalar_lea.vmem [#allocation7], %s1774
          %1777 = dma.done %s1772, 128
        $region52: #{tpu_custom_call.1} parent=47 // pred_fallthru
          _
      $region48: #{tpu_custom_call.1} parent=5 // pred_fallthru
        _
    $region6: #{tpu_custom_call.1} parent=1 // loop_footer
      %s20 = sadd.s32 1, %s16
    $region7: #{tpu_custom_call.1} parent=1 // loop_footer_branch
      %15 = sbr.rel target = $region3
    $region8: #{tpu_custom_call.1} parent=1 // loop_exit
      _
    %1778 = vsyncpa [#allocation3], 1
    %s1779 = scalar_lea.sflag [#allocation3], 1
    %1780 = vsyncpa %s1779, 1
    %1781 = vsyncpa [#allocation6], 1
    %1782 = vsyncpa [#allocation4], 1
    %s1783 = scalar_lea.sflag [#allocation4], 1
    %1784 = vsyncpa %s1783, 1

</llo_original>
